<compile_context>
chip_gen: v7x
topology: tpu7x:2x2x1
jax: 0.10.0
libtpu: 0.0.40
codegen_flags: <defaults>
</compile_context>

<pallas_src>
import jax
import jax.numpy as jnp
from jax.experimental import pallas as pl
from jax.experimental.pallas import tpu as pltpu

BN_EPS = 1e-5
LANE = 128


def _round_up(v, m):
    return ((v + m - 1) // m) * m


def _head_kernel(x_ref, w1_ref, gamma_ref, beta_ref, w2_ref, b2_ref, out_ref):
    """One (head, hidden-tile) grid step of the BnLabelClassifier forward."""
    t = pl.program_id(1)

    # Initialize the resident logits output with the fc3 bias on the first
    # hidden tile of this head (no VMEM scratch accumulator).
    @pl.when(t == 0)
    def _init():
        out_ref[...] = jnp.broadcast_to(b2_ref[...], out_ref.shape)

    # fc1 tile: (B, inc) @ (inc, tile_h), bf16 operands, f32 accumulation.
    # fc1 bias omitted: training-mode BatchNorm's mean subtraction cancels any
    # per-feature constant exactly.
    h = jnp.dot(x_ref[...], w1_ref[...], preferred_element_type=jnp.float32)

    # BatchNorm1d (training mode): batch mean + centered two-pass biased
    # variance (review: avoids cancellation of E[h^2]-E[h]^2), affine folded
    # into one FMA, fused with ReLU.
    inv_b = 1.0 / h.shape[0]
    mean = jnp.sum(h, axis=0, keepdims=True) * inv_b
    d = h - mean
    var = jnp.sum(d * d, axis=0, keepdims=True) * inv_b
    scale = gamma_ref[...] * jax.lax.rsqrt(var + BN_EPS)
    h = jnp.maximum(d * scale + beta_ref[...], 0.0)

    # TODO(synk): Dropout(0.5) between ReLU and fc3 is identity here (eval
    # behaviour); training-mode dropout would need an RNG mask.

    # fc3 tile contribution accumulated directly into the resident output
    # (raw logits; softmax=False in MEDM_any_2c).  The h->bf16 cast is one
    # tiny VPU pass kept so fc3 runs on the native bf16 MXU path with the
    # pre-cast bf16 W2 (cheaper than casting W2 up to f32 in-kernel).
    out_ref[...] += jnp.dot(h.astype(jnp.bfloat16), w2_ref[...],
                            preferred_element_type=jnp.float32)


def _choose_tile_h(inc, hidden_pad, n_pad, budget_bytes):
    """Largest lane-aligned divisor of hidden_pad whose double-buffered W1/W2
    tiles (bf16) fit the budget.  Collapses the hidden grid axis to a single
    step for small shapes; only tiles when shapes grow (review item #2 / #6).
    """
    for mult in range(hidden_pad // LANE, 0, -1):
        th = mult * LANE
        if hidden_pad % th:
            continue
        tile_bytes = 2 * (inc * th + th * n_pad) * 2  # 2 buffers, bf16
        if tile_bytes <= budget_bytes:
            return th
    return LANE


def prepare_head_params(head_params):
    """One-time parameter preprocessing for the classifier heads.

    head_params: sequence (one entry per head) of tuples
        (w1, b1, gamma, beta, w2, b2) with
        w1: (feature_dim, hidden), b1: any shape (unused, see note),
        gamma/beta: (hidden,) or (1, hidden),
        w2: (hidden, num_classes), b2: (num_classes,) or (1, num_classes).

    Padding to lane-dense widths and bf16 casting happen HERE (once), not in
    the forward pass -- the biggest-ticket item from the performance review.
    Padded hidden columns get zero W1 columns and zero W2 rows, so they
    contribute exactly zero to the logits.
    """
    num_heads = len(head_params)
    inc, hidden = head_params[0][0].shape
    num_classes = head_params[0][4].shape[1]
    hidden_pad = _round_up(hidden, LANE)
    n_pad = _round_up(max(num_classes, LANE), LANE)

    w1s, gammas, betas, w2s, b2s = [], [], [], [], []
    for (w1, b1, gamma, beta, w2, b2) in head_params:
        # b1 is cancelled exactly by training-mode (batch-stat) BatchNorm.
        del b1
        w1p = jnp.zeros((inc, hidden_pad), jnp.float32).at[:, :hidden].set(w1)
        g = jnp.zeros((1, hidden_pad), jnp.float32).at[:, :hidden].set(
            jnp.reshape(gamma, (1, hidden)))
        bt = jnp.zeros((1, hidden_pad), jnp.float32).at[:, :hidden].set(
            jnp.reshape(beta, (1, hidden)))
        w2p = jnp.zeros((hidden_pad, n_pad), jnp.float32).at[
            :hidden, :num_classes].set(w2)
        b2p = jnp.zeros((1, n_pad), jnp.float32).at[:, :num_classes].set(
            jnp.reshape(b2, (1, num_classes)))
        w1s.append(w1p.astype(jnp.bfloat16))
        gammas.append(g)
        betas.append(bt)
        w2s.append(w2p.astype(jnp.bfloat16))
        b2s.append(b2p)

    return dict(
        w1=jnp.stack(w1s), gamma=jnp.stack(gammas), beta=jnp.stack(betas),
        w2=jnp.stack(w2s), b2=jnp.stack(b2s),
        inc=inc, hidden=hidden, hidden_pad=hidden_pad,
        num_classes=num_classes, n_pad=n_pad, num_heads=num_heads)


def medm_heads_forward(x, params, *, vmem_tile_budget_bytes=8 * 1024 * 1024):
    """Apply all prepared BnLabelClassifier heads to features x: (B, inc).

    Returns a tuple of raw-logit arrays, one (B, num_classes) per head,
    mirroring MEDM_any_2c's (clabel_pred_1, clabel_pred_2).
    """
    B, inc = x.shape
    assert inc == params["inc"], "feature dim mismatch with prepared params"
    hidden_pad = params["hidden_pad"]
    n_pad = params["n_pad"]
    num_heads = params["num_heads"]

    tile_h = _choose_tile_h(inc, hidden_pad, n_pad, vmem_tile_budget_bytes)
    grid = (num_heads, hidden_pad // tile_h)

    # Per-call activation cast only (weights were pre-cast once in prepare).
    x_bf = x.astype(jnp.bfloat16)

    out = pl.pallas_call(
        _head_kernel,
        out_shape=jax.ShapeDtypeStruct((num_heads, B, n_pad), jnp.float32),
        grid=grid,
        in_specs=[
            pl.BlockSpec((B, inc), lambda h, t: (0, 0)),                # x (resident)
            pl.BlockSpec((None, inc, tile_h), lambda h, t: (h, 0, t)),  # W1 tile
            pl.BlockSpec((None, 1, tile_h), lambda h, t: (h, 0, t)),    # gamma tile
            pl.BlockSpec((None, 1, tile_h), lambda h, t: (h, 0, t)),    # beta tile
            pl.BlockSpec((None, tile_h, n_pad), lambda h, t: (h, t, 0)),  # W2 tile
            pl.BlockSpec((None, 1, n_pad), lambda h, t: (h, 0, 0)),     # b2
        ],
        # Output block constant across the hidden axis -> resident accumulator.
        out_specs=pl.BlockSpec((None, B, n_pad), lambda h, t: (h, 0, 0)),
        compiler_params=pltpu.CompilerParams(
            # heads are independent (megacore-shardable); hidden is a reduction.
            dimension_semantics=("parallel", "arbitrary"),
            # Conservative scoped-VMEM cap, safe on v5e/v6e/v7x; the tile
            # budget above keeps double-buffered tiles well below this.
            vmem_limit_bytes=32 * 1024 * 1024,
        ),
    )(x_bf, params["w1"], params["gamma"], params["beta"],
      params["w2"], params["b2"])

    logits = out[:, :, :params["num_classes"]]
    return tuple(logits[i] for i in range(num_heads))


def reference_head_forward(x, w1, b1, gamma, beta, w2, b2):
    """Full-precision JAX reference of one BnLabelClassifier (softmax=False),
    training-mode BatchNorm, Dropout as identity."""
    h = x @ w1 + b1
    mean = jnp.mean(h, axis=0, keepdims=True)
    var = jnp.mean((h - mean) ** 2, axis=0, keepdims=True)
    h = (h - mean) * jax.lax.rsqrt(var + BN_EPS) * jnp.reshape(gamma, (1, -1)) \
        + jnp.reshape(beta, (1, -1))
    h = jnp.maximum(h, 0.0)
    return h @ w2 + jnp.reshape(b2, (1, -1))


if __name__ == "__main__":
    # Small shapes consistent with the module: resnet18 backbone features
    # (feature_dim=512), BnLabelClassifier hidden=1000 (fixed in the module),
    # num_classes=12 (MEDM_any_2c default), small batch.
    B, FEATURE_DIM, HIDDEN, NUM_CLASSES = 8, 512, 1000, 12

    keys = jax.random.split(jax.random.PRNGKey(0), 9)
    kx = keys[0]

    x = jax.random.normal(kx, (B, FEATURE_DIM), dtype=jnp.float32)

    def make_head(kw1, kb1, kw2, kb2):
        lim1 = 1.0 / (FEATURE_DIM ** 0.5)
        w1 = jax.random.uniform(kw1, (FEATURE_DIM, HIDDEN), jnp.float32, -lim1, lim1)
        b1 = jax.random.uniform(kb1, (1, HIDDEN), jnp.float32, -lim1, lim1)
        gamma = jnp.ones((HIDDEN,), jnp.float32)    # BatchNorm1d weight init
        beta = jnp.zeros((HIDDEN,), jnp.float32)    # BatchNorm1d bias init
        lim2 = 1.0 / (HIDDEN ** 0.5)
        w2 = jax.random.uniform(kw2, (HIDDEN, NUM_CLASSES), jnp.float32, -lim2, lim2)
        b2 = jax.random.uniform(kb2, (1, NUM_CLASSES), jnp.float32, -lim2, lim2)
        return (w1, b1, gamma, beta, w2, b2)

    head1 = make_head(*keys[1:5])
    head2 = make_head(*keys[5:9])

    # One-time parameter preprocessing (padding / bf16 / stacking).
    params = prepare_head_params([head1, head2])

    pred1, pred2 = medm_heads_forward(x, params)
    pred1, pred2 = jax.block_until_ready((pred1, pred2))

    ref1 = reference_head_forward(x, *head1)
    ref2 = reference_head_forward(x, *head2)

    assert pred1.shape == (B, NUM_CLASSES) and pred2.shape == (B, NUM_CLASSES)
    err1 = float(jnp.max(jnp.abs(pred1 - ref1)))
    err2 = float(jnp.max(jnp.abs(pred2 - ref2)))
    # bf16 matmul operands => relaxed tolerance vs the f32 reference.
    assert err1 < 5e-2, f"head1 mismatch vs reference: max abs err {err1}"
    assert err2 < 5e-2, f"head2 mismatch vs reference: max abs err {err2}"

    print("KERNEL_OK")
</pallas_src>

<mosaic_0001>
module attributes {stable_mosaic.version = 11 : i64} {
  func.func @_head_kernel(%arg0: i32, %arg1: i32, %arg2: memref<8x512xbf16, #tpu.memory_space<vmem>>, %arg3: memref<1x512x1024xbf16, #tpu.memory_space<vmem>>, %arg4: memref<1x1x1024xf32, #tpu.memory_space<vmem>>, %arg5: memref<1x1x1024xf32, #tpu.memory_space<vmem>>, %arg6: memref<1x1024x128xbf16, #tpu.memory_space<vmem>>, %arg7: memref<1x1x128xf32, #tpu.memory_space<vmem>>, %arg8: memref<1x8x128xf32, #tpu.memory_space<vmem>>) attributes {dimension_semantics = [#tpu.dimension_semantics<parallel>, #tpu.dimension_semantics<arbitrary>], iteration_bounds = array<i64: 2, 1>, scalar_prefetch = 0 : i64, scratch_operands = 0 : i64, tpu.core_type = #tpu.core_type<tc>, window_params = [{pipeline_mode = #tpu.pipeline_mode<synchronous>, transform_indices = @transform_0, window_bounds = array<i64: 8, 512>}, {transform_indices = @transform_1, window_bounds = array<i64: 1, 512, 1024>}, {transform_indices = @transform_2, window_bounds = array<i64: 1, 1, 1024>}, {transform_indices = @transform_3, window_bounds = array<i64: 1, 1, 1024>}, {transform_indices = @transform_4, window_bounds = array<i64: 1, 1024, 128>}, {transform_indices = @transform_5, window_bounds = array<i64: 1, 1, 128>}, {transform_indices = @transform_6, window_bounds = array<i64: 1, 8, 128>}]} {
    %c0_i32 = arith.constant 0 : i32
    %0 = arith.cmpi eq, %arg1, %c0_i32 : i32
    %1 = arith.extui %0 : i1 to i32
    %c0_i32_0 = arith.constant 0 : i32
    %2 = arith.cmpi ne, %1, %c0_i32_0 : i32
    scf.if %2 {
      %c0_27 = arith.constant 0 : index
      %c0_28 = arith.constant 0 : index
      %c0_29 = arith.constant 0 : index
      %42 = vector.load %arg7[%c0_27, %c0_28, %c0_29] : memref<1x1x128xf32, #tpu.memory_space<vmem>>, vector<1x1x128xf32>
      %43 = vector.shape_cast %42 : vector<1x1x128xf32> to vector<1x128xf32>
      %44 = vector.shape_cast %43 : vector<1x128xf32> to vector<1x128xf32>
      %45 = vector.broadcast %44 : vector<1x128xf32> to vector<8x128xf32>
      %c0_30 = arith.constant 0 : index
      %c0_31 = arith.constant 0 : index
      %c0_32 = arith.constant 0 : index
      %46 = vector.load %arg8[%c0_30, %c0_31, %c0_32] : memref<1x8x128xf32, #tpu.memory_space<vmem>>, vector<1x8x128xf32>
      %47 = vector.shape_cast %46 : vector<1x8x128xf32> to vector<8x128xf32>
      %48 = vector.shape_cast %45 : vector<8x128xf32> to vector<1x8x128xf32>
      tpu.vector_store %arg8[%c0_30, %c0_31, %c0_32], %48 {strides = array<i32>} : memref<1x8x128xf32, #tpu.memory_space<vmem>>, vector<1x8x128xf32>,
    } else {
    }
    %c0 = arith.constant 0 : index
    %c0_1 = arith.constant 0 : index
    %3 = vector.load %arg2[%c0, %c0_1] : memref<8x512xbf16, #tpu.memory_space<vmem>>, vector<8x512xbf16>
    %c0_2 = arith.constant 0 : index
    %c0_3 = arith.constant 0 : index
    %c0_4 = arith.constant 0 : index
    %4 = vector.load %arg3[%c0_2, %c0_3, %c0_4] : memref<1x512x1024xbf16, #tpu.memory_space<vmem>>, vector<1x512x1024xbf16>
    %5 = vector.shape_cast %4 : vector<1x512x1024xbf16> to vector<512x1024xbf16>
    %cst = arith.constant dense<0.000000e+00> : vector<8x1024xf32>
    %6 = tpu.matmul %3, %5, %cst {dimension_numbers = #tpu.dot_dimension_numbers<[1], [0], [0], [1], [0, 0, 1, 1], [], []>} : vector<8x512xbf16>, vector<512x1024xbf16>, vector<8x1024xf32> -> vector<8x1024xf32>
    %cst_5 = arith.constant dense<0.000000e+00> : vector<1024xf32>
    %7 = vector.multi_reduction <add>, %6, %cst_5 [0] : vector<8x1024xf32> to vector<1024xf32>
    %8 = vector.shape_cast %7 : vector<1024xf32> to vector<1x1024xf32>
    %cst_6 = arith.constant 1.250000e-01 : f32
    %9 = vector.broadcast %cst_6 : f32 to vector<1x1024xf32>
    %10 = arith.mulf %8, %9 : vector<1x1024xf32>
    %11 = vector.broadcast %10 : vector<1x1024xf32> to vector<8x1024xf32>
    %12 = arith.subf %6, %11 : vector<8x1024xf32>
    %13 = arith.mulf %12, %12 : vector<8x1024xf32>
    %cst_7 = arith.constant dense<0.000000e+00> : vector<1024xf32>
    %14 = vector.multi_reduction <add>, %13, %cst_7 [0] : vector<8x1024xf32> to vector<1024xf32>
    %15 = vector.shape_cast %14 : vector<1024xf32> to vector<1x1024xf32>
    %cst_8 = arith.constant 1.250000e-01 : f32
    %16 = vector.broadcast %cst_8 : f32 to vector<1x1024xf32>
    %17 = arith.mulf %15, %16 : vector<1x1024xf32>
    %c0_9 = arith.constant 0 : index
    %c0_10 = arith.constant 0 : index
    %c0_11 = arith.constant 0 : index
    %18 = vector.load %arg4[%c0_9, %c0_10, %c0_11] : memref<1x1x1024xf32, #tpu.memory_space<vmem>>, vector<1x1x1024xf32>
    %19 = vector.shape_cast %18 : vector<1x1x1024xf32> to vector<1x1024xf32>
    %cst_12 = arith.constant 9.99999974E-6 : f32
    %20 = vector.broadcast %cst_12 : f32 to vector<1x1024xf32>
    %21 = arith.addf %17, %20 : vector<1x1024xf32>
    %22 = math.rsqrt %21 : vector<1x1024xf32>
    %23 = arith.mulf %19, %22 : vector<1x1024xf32>
    %24 = vector.broadcast %23 : vector<1x1024xf32> to vector<8x1024xf32>
    %25 = arith.mulf %12, %24 : vector<8x1024xf32>
    %c0_13 = arith.constant 0 : index
    %c0_14 = arith.constant 0 : index
    %c0_15 = arith.constant 0 : index
    %26 = vector.load %arg5[%c0_13, %c0_14, %c0_15] : memref<1x1x1024xf32, #tpu.memory_space<vmem>>, vector<1x1x1024xf32>
    %27 = vector.shape_cast %26 : vector<1x1x1024xf32> to vector<1x1024xf32>
    %28 = vector.broadcast %27 : vector<1x1024xf32> to vector<8x1024xf32>
    %29 = arith.addf %25, %28 : vector<8x1024xf32>
    %cst_16 = arith.constant 0.000000e+00 : f32
    %30 = vector.broadcast %cst_16 : f32 to vector<8x1024xf32>
    %31 = arith.maximumf %29, %30 : vector<8x1024xf32>
    %c0_17 = arith.constant 0 : index
    %c0_18 = arith.constant 0 : index
    %c0_19 = arith.constant 0 : index
    %32 = vector.load %arg8[%c0_17, %c0_18, %c0_19] : memref<1x8x128xf32, #tpu.memory_space<vmem>>, vector<1x8x128xf32>
    %33 = vector.shape_cast %32 : vector<1x8x128xf32> to vector<8x128xf32>
    %34 = arith.truncf %31 : vector<8x1024xf32> to vector<8x1024xbf16>
    %c0_20 = arith.constant 0 : index
    %c0_21 = arith.constant 0 : index
    %c0_22 = arith.constant 0 : index
    %35 = vector.load %arg6[%c0_20, %c0_21, %c0_22] : memref<1x1024x128xbf16, #tpu.memory_space<vmem>>, vector<1x1024x128xbf16>
    %36 = vector.shape_cast %35 : vector<1x1024x128xbf16> to vector<1024x128xbf16>
    %cst_23 = arith.constant dense<0.000000e+00> : vector<8x128xf32>
    %37 = tpu.matmul %34, %36, %cst_23 {dimension_numbers = #tpu.dot_dimension_numbers<[1], [0], [0], [1], [0, 0, 1, 1], [], []>} : vector<8x1024xbf16>, vector<1024x128xbf16>, vector<8x128xf32> -> vector<8x128xf32>
    %38 = arith.addf %33, %37 : vector<8x128xf32>
    %c0_24 = arith.constant 0 : index
    %c0_25 = arith.constant 0 : index
    %c0_26 = arith.constant 0 : index
    %39 = vector.load %arg8[%c0_24, %c0_25, %c0_26] : memref<1x8x128xf32, #tpu.memory_space<vmem>>, vector<1x8x128xf32>
    %40 = vector.shape_cast %39 : vector<1x8x128xf32> to vector<8x128xf32>
    %41 = vector.shape_cast %38 : vector<8x128xf32> to vector<1x8x128xf32>
    tpu.vector_store %arg8[%c0_24, %c0_25, %c0_26], %41 {strides = array<i32>} : memref<1x8x128xf32, #tpu.memory_space<vmem>>, vector<1x8x128xf32>,
    return
  }
  func.func @transform_0(%arg0: i32, %arg1: i32) -> (i32, i32) {
    %c0_i32 = arith.constant 0 : i32
    %c0_i32_0 = arith.constant 0 : i32
    %c0_i32_1 = arith.constant 0 : i32
    return %c0_i32, %c0_i32_0 : i32, i32
  }
  func.func @transform_1(%arg0: i32, %arg1: i32) -> (i32, i32, i32) {
    %c0_i32 = arith.constant 0 : i32
    %c0_i32_0 = arith.constant 0 : i32
    return %arg0, %c0_i32, %arg1 : i32, i32, i32
  }
  func.func @transform_2(%arg0: i32, %arg1: i32) -> (i32, i32, i32) {
    %c0_i32 = arith.constant 0 : i32
    %c0_i32_0 = arith.constant 0 : i32
    return %arg0, %c0_i32, %arg1 : i32, i32, i32
  }
  func.func @transform_3(%arg0: i32, %arg1: i32) -> (i32, i32, i32) {
    %c0_i32 = arith.constant 0 : i32
    %c0_i32_0 = arith.constant 0 : i32
    return %arg0, %c0_i32, %arg1 : i32, i32, i32
  }
  func.func @transform_4(%arg0: i32, %arg1: i32) -> (i32, i32, i32) {
    %c0_i32 = arith.constant 0 : i32
    %c0_i32_0 = arith.constant 0 : i32
    return %arg0, %arg1, %c0_i32 : i32, i32, i32
  }
  func.func @transform_5(%arg0: i32, %arg1: i32) -> (i32, i32, i32) {
    %c0_i32 = arith.constant 0 : i32
    %c0_i32_0 = arith.constant 0 : i32
    %c0_i32_1 = arith.constant 0 : i32
    return %arg0, %c0_i32, %c0_i32_0 : i32, i32, i32
  }
  func.func @transform_6(%arg0: i32, %arg1: i32) -> (i32, i32, i32) {
    %c0_i32 = arith.constant 0 : i32
    %c0_i32_0 = arith.constant 0 : i32
    %c0_i32_1 = arith.constant 0 : i32
    return %arg0, %c0_i32, %c0_i32_0 : i32, i32, i32
  }
}

</mosaic_0001>

<llo_original>
// kernel: tpu_custom_call.1
$region0: #{tpu_custom_call.1}
  #allocation0 [shape = 'u32[]', space=smem, size = 0x4, offset = 0x4, fixed_abs, tag = 'smem constant byte address 0x4 - core index']
  #allocation1 [shape = 'u32[144,128]{1,0:T(1,128)}', space=vmem, size = 0x12000, scoped, tag = 'internal scratch']
  %s0 = inlined_call_operand.hbm [shape: bf16[8,512], index: 0, kind: input, shape index: {}]
  %s1 = inlined_call_operand.hbm [shape: bf16[2,512,1024], index: 1, kind: input, shape index: {}]
  %s2 = inlined_call_operand.hbm [shape: f32[2,1,1024], index: 2, kind: input, shape index: {}]
  %s3 = inlined_call_operand.hbm [shape: f32[2,1,1024], index: 3, kind: input, shape index: {}]
  %s4 = inlined_call_operand.hbm [shape: bf16[2,1024,128], index: 4, kind: input, shape index: {}]
  %s5 = inlined_call_operand.hbm [shape: f32[2,1,128], index: 5, kind: input, shape index: {}]
  %s6 = inlined_call_operand.hbm [shape: f32[2,8,128], index: 6, kind: output, shape index: {}]
  %s7 = sld [smem:[#allocation0]]
  $region85: #{tpu_custom_call.1} parent=0
    _
  %s9 = ssub.s32 1, %s7
  %s10 = scalar_select 0, %s9, %s7
  $region1: #{tpu_custom_call.1} parent=0
    #allocation2 [shape = 'u8[8192]{0}', space=vmem, size = 0x2000, scoped, tag = 'input window, operand 0, single buffered']
    #allocation3 [shape = 's32[2]{0}', space=sflag, size = 0x8, scoped, tag = 'scoped memory for tpu_custom_call.1']
    #allocation4 [shape = 's32[2]{0}', space=sflag, size = 0x8, scoped, tag = 'scoped memory for tpu_custom_call.1']
    #allocation5 [shape = 'u8[2097152]{0}', space=vmem, size = 0x200000, scoped, tag = 'input window, operand 1']
    #allocation6 [shape = 's32[2]{0}', space=sflag, size = 0x8, scoped, tag = 'scoped memory for tpu_custom_call.1']
    #allocation7 [shape = 'u8[8192]{0}', space=vmem, size = 0x2000, scoped, tag = 'input window, operand 2']
    #allocation8 [shape = 'u8[8192]{0}', space=vmem, size = 0x2000, scoped, tag = 'input window, operand 3']
    #allocation9 [shape = 's32[2]{0}', space=sflag, size = 0x8, scoped, tag = 'scoped memory for tpu_custom_call.1']
    #allocation10 [shape = 'u8[524288]{0}', space=vmem, size = 0x80000, scoped, tag = 'input window, operand 4']
    #allocation11 [shape = 'u8[1024]{0}', space=vmem, size = 0x400, scoped, tag = 'input window, operand 5']
    #allocation12 [shape = 's32[2]{0}', space=sflag, size = 0x8, scoped, tag = 'scoped memory for tpu_custom_call.1']
    #allocation13 [shape = 'u8[8192]{0}', space=vmem, size = 0x2000, scoped, tag = 'output window, operand 0']
    %11 = vsyncpa [#allocation3], 0
    %12 = vsyncpa [#allocation6], 0
    %s13 = scalar_lea.sflag [#allocation6], 1
    %14 = vsyncpa %s13, 0
    %15 = vsyncpa [#allocation9], 0
    %s16 = scalar_lea.sflag [#allocation9], 1
    %17 = vsyncpa %s16, 0
    %18 = vsyncpa [#allocation12], 0
    %s19 = scalar_lea.sflag [#allocation12], 1
    %20 = vsyncpa %s19, 0
    %21 = vsyncpa [#allocation4], 0
    %s22 = scalar_lea.sflag [#allocation4], 1
    %23 = vsyncpa %s22, 0
    loop: start=0, step=1, limit=4
    $region2: #{tpu_custom_call.1} parent=1 // loop_pre_header
      _
    $region3: #{tpu_custom_call.1} parent=1 // loop_header
      %s25 = sphi 0, %s29
      %p26 = scmp.ge.s32.totalorder %s25, 4
      %s32 = sphi 0, %s44
      %s33 = sphi 0, %s40
      %s34 = sphi 0, %s32
      %s35 = sphi 0, %s33
      %s36 = sphi 0, %s34
      %s37 = sphi 0, %s35
      %s45 = sphi 0, %s45
      %s47 = sphi 0, %s45
      %s48 = sphi 0, %s47
      %s62 = sphi 0, %s48
      %s70 = sphi 0, %s72
      %s73 = sphi 0, %s70
      %s74 = sphi 0, %s73
      %s90 = sphi 0, %s74
      %s98 = sphi 0, %s100
      %s101 = sphi 0, %s98
      %s102 = sphi 0, %s101
      %s118 = sphi 0, %s102
      %s126 = sphi 0, %s128
      %s129 = sphi 0, %s126
      %s130 = sphi 0, %s129
      %s146 = sphi 0, %s130
      %s154 = sphi 0, %s156
      %s157 = sphi 0, %s154
      %s158 = sphi 0, %s157
      %s174 = sphi 0, %s158
      %s180 = sphi 0, %s182
      %s183 = sphi 0, %s180
      %s184 = sphi 0, %s183
      %s200 = sphi 0, %s184
      %s206 = sphi 0, %s208
      %s209 = sphi 0, %s206
      %s210 = sphi 0, %s209
      %s226 = sphi 0, %s210
    $region4: #{tpu_custom_call.1} parent=1 // loop_header_branch
      %28 = sbr.rel (%p26) target = $region8
    $region5: #{tpu_custom_call.1} parent=1 // loop_body
      %s30 = ssub.s32 %s25, 1
      %s31 = ssub.s32 %s25, 2
      %s38 = sadd.s32 1, %s33
      %p39 = scmp.ge.s32.totalorder %s38, 1
      %s40 = scalar_select %p39, 0, %s38
      %s41 = sadd.s32 1, %s32
      %s42 = scalar_select %p39, %s41, %s32
      %p43 = scmp.ge.s32.totalorder %s42, 2
      %s44 = scalar_select %p43, 0, %s42
      %s46 = sadd.s32 %s45, 1
      %p49 = scmp.eq.s32.totalorder %s25, 1
      %p50 = scmp.ne.s32.totalorder %s45, %s47
      %p51 = scmp.eq.s32.totalorder %s25, 0
      %p52 = por %p50, %p51
      %p53 = scmp.ne.s32.totalorder %s45, %s47
      %p54 = scmp.eq.s32.totalorder %s30, 1
      %p55 = por %p53, %p54
      %p56 = scmp.ne.s32.totalorder %s47, %s48
      %p57 = scmp.eq.s32.totalorder %s30, 0
      %p58 = por %p56, %p57
      %p59 = scmp.ne.s32.totalorder %s47, %s48
      %p60 = scmp.eq.s32.totalorder %s31, 1
      %p61 = por %p59, %p60
      %p63 = scmp.ne.s32.totalorder %s48, %s62
      %p64 = scmp.eq.s32.totalorder %s31, 0
      %p65 = por %p63, %p64
      %s66 = ssub.s32 %s32, %s44
      %s67 = ssub.s32 %s33, %s40
      %s68 = sor.u32 %s66, %s67
      %p69 = scmp.eq.s32.totalorder %s68, 0
      %s71 = sadd.s32 %s70, 1
      %s72 = scalar_select %p69, %s70, %s71
      %p75 = pneg %p69
      %p76 = scmp.eq.s32.totalorder %s25, 1
      %p77 = por %p75, %p76
      %p78 = scmp.ne.s32.totalorder %s70, %s73
      %p79 = scmp.eq.s32.totalorder %s25, 0
      %p80 = por %p78, %p79
      %p81 = scmp.ne.s32.totalorder %s70, %s73
      %p82 = scmp.eq.s32.totalorder %s30, 1
      %p83 = por %p81, %p82
      %p84 = scmp.ne.s32.totalorder %s73, %s74
      %p85 = scmp.eq.s32.totalorder %s30, 0
      %p86 = por %p84, %p85
      %p87 = scmp.ne.s32.totalorder %s73, %s74
      %p88 = scmp.eq.s32.totalorder %s31, 1
      %p89 = por %p87, %p88
      %p91 = scmp.ne.s32.totalorder %s74, %s90
      %p92 = scmp.eq.s32.totalorder %s31, 0
      %p93 = por %p91, %p92
      %s94 = ssub.s32 %s32, %s44
      %s95 = ssub.s32 %s33, %s40
      %s96 = sor.u32 %s94, %s95
      %p97 = scmp.eq.s32.totalorder %s96, 0
      %s99 = sadd.s32 %s98, 1
      %s100 = scalar_select %p97, %s98, %s99
      %p103 = pneg %p97
      %p104 = scmp.eq.s32.totalorder %s25, 1
      %p105 = por %p103, %p104
      %p106 = scmp.ne.s32.totalorder %s98, %s101
      %p107 = scmp.eq.s32.totalorder %s25, 0
      %p108 = por %p106, %p107
      %p109 = scmp.ne.s32.totalorder %s98, %s101
      %p110 = scmp.eq.s32.totalorder %s30, 1
      %p111 = por %p109, %p110
      %p112 = scmp.ne.s32.totalorder %s101, %s102
      %p113 = scmp.eq.s32.totalorder %s30, 0
      %p114 = por %p112, %p113
      %p115 = scmp.ne.s32.totalorder %s101, %s102
      %p116 = scmp.eq.s32.totalorder %s31, 1
      %p117 = por %p115, %p116
      %p119 = scmp.ne.s32.totalorder %s102, %s118
      %p120 = scmp.eq.s32.totalorder %s31, 0
      %p121 = por %p119, %p120
      %s122 = ssub.s32 %s32, %s44
      %s123 = ssub.s32 %s33, %s40
      %s124 = sor.u32 %s122, %s123
      %p125 = scmp.eq.s32.totalorder %s124, 0
      %s127 = sadd.s32 %s126, 1
      %s128 = scalar_select %p125, %s126, %s127
      %p131 = pneg %p125
      %p132 = scmp.eq.s32.totalorder %s25, 1
      %p133 = por %p131, %p132
      %p134 = scmp.ne.s32.totalorder %s126, %s129
      %p135 = scmp.eq.s32.totalorder %s25, 0
      %p136 = por %p134, %p135
      %p137 = scmp.ne.s32.totalorder %s126, %s129
      %p138 = scmp.eq.s32.totalorder %s30, 1
      %p139 = por %p137, %p138
      %p140 = scmp.ne.s32.totalorder %s129, %s130
      %p141 = scmp.eq.s32.totalorder %s30, 0
      %p142 = por %p140, %p141
      %p143 = scmp.ne.s32.totalorder %s129, %s130
      %p144 = scmp.eq.s32.totalorder %s31, 1
      %p145 = por %p143, %p144
      %p147 = scmp.ne.s32.totalorder %s130, %s146
      %p148 = scmp.eq.s32.totalorder %s31, 0
      %p149 = por %p147, %p148
      %s150 = ssub.s32 %s32, %s44
      %s151 = ssub.s32 %s33, %s40
      %s152 = sor.u32 %s150, %s151
      %p153 = scmp.eq.s32.totalorder %s152, 0
      %s155 = sadd.s32 %s154, 1
      %s156 = scalar_select %p153, %s154, %s155
      %p159 = pneg %p153
      %p160 = scmp.eq.s32.totalorder %s25, 1
      %p161 = por %p159, %p160
      %p162 = scmp.ne.s32.totalorder %s154, %s157
      %p163 = scmp.eq.s32.totalorder %s25, 0
      %p164 = por %p162, %p163
      %p165 = scmp.ne.s32.totalorder %s154, %s157
      %p166 = scmp.eq.s32.totalorder %s30, 1
      %p167 = por %p165, %p166
      %p168 = scmp.ne.s32.totalorder %s157, %s158
      %p169 = scmp.eq.s32.totalorder %s30, 0
      %p170 = por %p168, %p169
      %p171 = scmp.ne.s32.totalorder %s157, %s158
      %p172 = scmp.eq.s32.totalorder %s31, 1
      %p173 = por %p171, %p172
      %p175 = scmp.ne.s32.totalorder %s158, %s174
      %p176 = scmp.eq.s32.totalorder %s31, 0
      %p177 = por %p175, %p176
      %s178 = ssub.s32 %s32, %s44
      %p179 = scmp.eq.s32.totalorder %s178, 0
      %s181 = sadd.s32 %s180, 1
      %s182 = scalar_select %p179, %s180, %s181
      %p185 = pneg %p179
      %p186 = scmp.eq.s32.totalorder %s25, 1
      %p187 = por %p185, %p186
      %p188 = scmp.ne.s32.totalorder %s180, %s183
      %p189 = scmp.eq.s32.totalorder %s25, 0
      %p190 = por %p188, %p189
      %p191 = scmp.ne.s32.totalorder %s180, %s183
      %p192 = scmp.eq.s32.totalorder %s30, 1
      %p193 = por %p191, %p192
      %p194 = scmp.ne.s32.totalorder %s183, %s184
      %p195 = scmp.eq.s32.totalorder %s30, 0
      %p196 = por %p194, %p195
      %p197 = scmp.ne.s32.totalorder %s183, %s184
      %p198 = scmp.eq.s32.totalorder %s31, 1
      %p199 = por %p197, %p198
      %p201 = scmp.ne.s32.totalorder %s184, %s200
      %p202 = scmp.eq.s32.totalorder %s31, 0
      %p203 = por %p201, %p202
      %s204 = ssub.s32 %s32, %s44
      %p205 = scmp.eq.s32.totalorder %s204, 0
      %s207 = sadd.s32 %s206, 1
      %s208 = scalar_select %p205, %s206, %s207
      %p211 = pneg %p205
      %p212 = scmp.eq.s32.totalorder %s25, 1
      %p213 = por %p211, %p212
      %p214 = scmp.ne.s32.totalorder %s206, %s209
      %p215 = scmp.eq.s32.totalorder %s25, 0
      %p216 = por %p214, %p215
      %p217 = scmp.ne.s32.totalorder %s206, %s209
      %p218 = scmp.eq.s32.totalorder %s30, 1
      %p219 = por %p217, %p218
      %p220 = scmp.ne.s32.totalorder %s209, %s210
      %p221 = scmp.eq.s32.totalorder %s30, 0
      %p222 = por %p220, %p221
      %p223 = scmp.ne.s32.totalorder %s209, %s210
      %p224 = scmp.eq.s32.totalorder %s31, 1
      %p225 = por %p223, %p224
      %p227 = scmp.ne.s32.totalorder %s210, %s226
      %p228 = scmp.eq.s32.totalorder %s31, 0
      %p229 = por %p227, %p228
      %p230 = scmp.le.s32.totalorder 1, %s25
      %p231 = scmp.lt.s32.totalorder %s25, 3
      %p232 = pnand %p230, %p231
      %p233 = pneg %p232
      // Predicated region
      $region9: #{tpu_custom_call.1} parent=5 // pred_check
        _
      $region10: #{tpu_custom_call.1} parent=5 // pred_check_branch
        %235 = sbr.rel (%p232) target = $region12
      $region11: #{tpu_custom_call.1} parent=5 // pred_region
        %s236 = ssub.s32 %s25, 1
        // Predicated region
        $region13: #{tpu_custom_call.1} parent=11 // pred_check
          %p237 = pneg %p58
        $region14: #{tpu_custom_call.1} parent=11 // pred_check_branch
          %239 = sbr.rel (%p237) target = $region16
        $region15: #{tpu_custom_call.1} parent=11 // pred_region
          %s241 = ssub.s32 256, 256
          %242 = vsyncadd [#allocation3], %s241
          %s244 = sshll.u32 [#allocation2], 4
          %s245 = int_to_ptr.vmem [resolvable:$true] %s244
          %247 = dma.hbm_to_vmem [thread:$0]  %s0, 256, %s245, [#allocation3]
        $region16: #{tpu_custom_call.1} parent=11 // pred_fallthru
          _
      $region12: #{tpu_custom_call.1} parent=5 // pred_fallthru
        _
      %p248 = scmp.lt.s32.totalorder %s25, 2
      // Predicated region
      $region17: #{tpu_custom_call.1} parent=5 // pred_check
        %p249 = pneg %p248
      $region18: #{tpu_custom_call.1} parent=5 // pred_check_branch
        %251 = sbr.rel (%p249) target = $region20
      $region19: #{tpu_custom_call.1} parent=5 // pred_region
        // Predicated region
        $region21: #{tpu_custom_call.1} parent=19 // pred_check
          %p252 = pneg %p80
        $region22: #{tpu_custom_call.1} parent=19 // pred_check_branch
          %254 = sbr.rel (%p252) target = $region24
        $region23: #{tpu_custom_call.1} parent=19 // pred_region
          %s255 = sand.u32 %s25, 1
          %s256 = scalar_lea.sflag [#allocation6], %s255
          %s257 = sand.u32 %s70, 1
          %s258 = smul.addr %s257, 2048
          %s259 = scalar_lea.vmem [#allocation5], %s258
          %s260 = smul.u32 8, %s33
          %s262 = ssub.s32 32768, 32768
          %263 = vsyncadd %s256, %s262
          %s264 = smul.addr %s32, 512
          %s265 = sadd.s32 %s260, %s264
          %s266 = smul.addr %s265, 64
          %s267 = scalar_lea.hbm %s1, %s266
          %s268 = sshll.u32 %s259, 4
          %s269 = int_to_ptr.vmem [resolvable:$true] %s268
          %274 = dma.hbm_to_vmem [thread:$0]  %s267, 32768, %s269, %s256, 512, 512, 32
        $region24: #{tpu_custom_call.1} parent=19 // pred_fallthru
          _
        // Predicated region
        $region25: #{tpu_custom_call.1} parent=19 // pred_check
          %p275 = pneg %p108
        $region26: #{tpu_custom_call.1} parent=19 // pred_check_branch
          %277 = sbr.rel (%p275) target = $region28
        $region27: #{tpu_custom_call.1} parent=19 // pred_region
          %s278 = sand.u32 %s25, 1
          %s279 = scalar_lea.sflag [#allocation6], %s278
          %s280 = sand.u32 %s98, 1
          %s281 = smul.addr %s280, 8
          %s282 = scalar_lea.vmem [#allocation7], %s281
          %s283 = smul.u32 8, %s33
          %s285 = ssub.s32 128, 128
          %286 = vsyncadd %s279, %s285
          %s287 = smul.addr %s32, 8
          %s288 = sadd.s32 %s283, %s287
          %s289 = smul.addr %s288, 16
          %s290 = scalar_lea.hbm %s2, %s289
          %s292 = sshll.u32 %s282, 4
          %s293 = int_to_ptr.vmem [resolvable:$true] %s292
          %295 = dma.hbm_to_vmem [thread:$0]  %s290, 128, %s293, %s279
        $region28: #{tpu_custom_call.1} parent=19 // pred_fallthru
          _
        // Predicated region
        $region29: #{tpu_custom_call.1} parent=19 // pred_check
          %p296 = pneg %p136
        $region30: #{tpu_custom_call.1} parent=19 // pred_check_branch
          %298 = sbr.rel (%p296) target = $region32
        $region31: #{tpu_custom_call.1} parent=19 // pred_region
          %s299 = sand.u32 %s25, 1
          %s300 = scalar_lea.sflag [#allocation9], %s299
          %s301 = sand.u32 %s126, 1
          %s302 = smul.addr %s301, 8
          %s303 = scalar_lea.vmem [#allocation8], %s302
          %s304 = smul.u32 8, %s33
          %s306 = ssub.s32 128, 128
          %307 = vsyncadd %s300, %s306
          %s308 = smul.addr %s32, 8
          %s309 = sadd.s32 %s304, %s308
          %s310 = smul.addr %s309, 16
          %s311 = scalar_lea.hbm %s3, %s310
          %s313 = sshll.u32 %s303, 4
          %s314 = int_to_ptr.vmem [resolvable:$true] %s313
          %316 = dma.hbm_to_vmem [thread:$0]  %s311, 128, %s314, %s300
        $region32: #{tpu_custom_call.1} parent=19 // pred_fallthru
          _
        // Predicated region
        $region33: #{tpu_custom_call.1} parent=19 // pred_check
          %p317 = pneg %p164
        $region34: #{tpu_custom_call.1} parent=19 // pred_check_branch
          %319 = sbr.rel (%p317) target = $region36
        $region35: #{tpu_custom_call.1} parent=19 // pred_region
          %s320 = sand.u32 %s25, 1
          %s321 = scalar_lea.sflag [#allocation9], %s320
          %s322 = sand.u32 %s154, 1
          %s323 = smul.addr %s322, 512
          %s324 = scalar_lea.vmem [#allocation10], %s323
          %s325 = smul.u32 128, %s33
          %s327 = ssub.s32 8192, 8192
          %328 = vsyncadd %s321, %s327
          %s329 = smul.addr %s32, 128
          %s330 = sadd.s32 %s325, %s329
          %s331 = smul.addr %s330, 64
          %s332 = scalar_lea.hbm %s4, %s331
          %s333 = sshll.u32 %s324, 4
          %s334 = int_to_ptr.vmem [resolvable:$true] %s333
          %339 = dma.hbm_to_vmem [thread:$0]  %s332, 8192, %s334, %s321, 64, 64, 4
        $region36: #{tpu_custom_call.1} parent=19 // pred_fallthru
          _
        // Predicated region
        $region37: #{tpu_custom_call.1} parent=19 // pred_check
          %p340 = pneg %p190
        $region38: #{tpu_custom_call.1} parent=19 // pred_check_branch
          %342 = sbr.rel (%p340) target = $region40
        $region39: #{tpu_custom_call.1} parent=19 // pred_region
          %s343 = sand.u32 %s180, 1
          %s344 = scalar_lea.sflag [#allocation12], %s343
          %s345 = sand.u32 %s180, 1
          %s346 = scalar_lea.vmem [#allocation11], %s345
          %s348 = ssub.s32 16, 16
          %349 = vsyncadd %s344, %s348
          %s350 = smul.addr %s32, 16
          %s351 = scalar_lea.hbm %s5, %s350
          %s353 = sshll.u32 %s346, 4
          %s354 = int_to_ptr.vmem [resolvable:$true] %s353
          %356 = dma.hbm_to_vmem [thread:$0]  %s351, 16, %s354, %s344
        $region40: #{tpu_custom_call.1} parent=19 // pred_fallthru
          _
      $region20: #{tpu_custom_call.1} parent=5 // pred_fallthru
        _
      %p357 = scmp.le.s32.totalorder 1, %s25
      %p358 = scmp.lt.s32.totalorder %s25, 3
      %p359 = pnand %p357, %p358
      %p360 = pneg %p359
      // Predicated region
      $region41: #{tpu_custom_call.1} parent=5 // pred_check
        _
      $region42: #{tpu_custom_call.1} parent=5 // pred_check_branch
        %362 = sbr.rel (%p359) target = $region44
      $region43: #{tpu_custom_call.1} parent=5 // pred_region
        %s363 = ssub.s32 %s25, 1
        // Predicated region
        $region45: #{tpu_custom_call.1} parent=43 // pred_check
          %p364 = pneg %p58
        $region46: #{tpu_custom_call.1} parent=43 // pred_check_branch
          %366 = sbr.rel (%p364) target = $region48
        $region47: #{tpu_custom_call.1} parent=43 // pred_region
          %367 = dma.done [#allocation3], 256
        $region48: #{tpu_custom_call.1} parent=43 // pred_fallthru
          _
        %s368 = sand.u32 %s30, 1
        %s369 = scalar_lea.sflag [#allocation6], %s368
        %s370 = sand.u32 %s73, 1
        %s371 = smul.addr %s370, 2048
        %s372 = scalar_lea.vmem [#allocation5], %s371
        // Predicated region
        $region49: #{tpu_custom_call.1} parent=43 // pred_check
          %p373 = pneg %p86
        $region50: #{tpu_custom_call.1} parent=43 // pred_check_branch
          %375 = sbr.rel (%p373) target = $region52
        $region51: #{tpu_custom_call.1} parent=43 // pred_region
          %376 = dma.done %s369, 32768
        $region52: #{tpu_custom_call.1} parent=43 // pred_fallthru
          _
        %s377 = sand.u32 %s30, 1
        %s378 = scalar_lea.sflag [#allocation6], %s377
        %s379 = sand.u32 %s101, 1
        %s380 = smul.addr %s379, 8
        %s381 = scalar_lea.vmem [#allocation7], %s380
        // Predicated region
        $region53: #{tpu_custom_call.1} parent=43 // pred_check
          %p382 = pneg %p114
        $region54: #{tpu_custom_call.1} parent=43 // pred_check_branch
          %384 = sbr.rel (%p382) target = $region56
        $region55: #{tpu_custom_call.1} parent=43 // pred_region
          %385 = dma.done %s378, 128
        $region56: #{tpu_custom_call.1} parent=43 // pred_fallthru
          _
        %s386 = sand.u32 %s30, 1
        %s387 = scalar_lea.sflag [#allocation9], %s386
        %s388 = sand.u32 %s129, 1
        %s389 = smul.addr %s388, 8
        %s390 = scalar_lea.vmem [#allocation8], %s389
        // Predicated region
        $region57: #{tpu_custom_call.1} parent=43 // pred_check
          %p391 = pneg %p142
        $region58: #{tpu_custom_call.1} parent=43 // pred_check_branch
          %393 = sbr.rel (%p391) target = $region60
        $region59: #{tpu_custom_call.1} parent=43 // pred_region
          %394 = dma.done %s387, 128
        $region60: #{tpu_custom_call.1} parent=43 // pred_fallthru
          _
        %s395 = sand.u32 %s30, 1
        %s396 = scalar_lea.sflag [#allocation9], %s395
        %s397 = sand.u32 %s157, 1
        %s398 = smul.addr %s397, 512
        %s399 = scalar_lea.vmem [#allocation10], %s398
        // Predicated region
        $region61: #{tpu_custom_call.1} parent=43 // pred_check
          %p400 = pneg %p170
        $region62: #{tpu_custom_call.1} parent=43 // pred_check_branch
          %402 = sbr.rel (%p400) target = $region64
        $region63: #{tpu_custom_call.1} parent=43 // pred_region
          %403 = dma.done %s396, 8192
        $region64: #{tpu_custom_call.1} parent=43 // pred_fallthru
          _
        %s404 = sand.u32 %s183, 1
        %s405 = scalar_lea.sflag [#allocation12], %s404
        %s406 = sand.u32 %s183, 1
        %s407 = scalar_lea.vmem [#allocation11], %s406
        // Predicated region
        $region65: #{tpu_custom_call.1} parent=43 // pred_check
          %p408 = pneg %p196
        $region66: #{tpu_custom_call.1} parent=43 // pred_check_branch
          %410 = sbr.rel (%p408) target = $region68
        $region67: #{tpu_custom_call.1} parent=43 // pred_region
          %411 = dma.done %s405, 16
        $region68: #{tpu_custom_call.1} parent=43 // pred_fallthru
          _
        %p412 = pneg %p58
        %p413 = pneg %p55
        %s414 = sand.u32 %s30, 1
        %s415 = scalar_lea.sflag [#allocation6], %s414
        %s416 = sand.u32 %s73, 1
        %s417 = smul.addr %s416, 2048
        %s418 = scalar_lea.vmem [#allocation5], %s417
        %p419 = pneg %p86
        %p420 = pneg %p83
        %s421 = sand.u32 %s30, 1
        %s422 = scalar_lea.sflag [#allocation6], %s421
        %s423 = sand.u32 %s101, 1
        %s424 = smul.addr %s423, 8
        %s425 = scalar_lea.vmem [#allocation7], %s424
        %p426 = pneg %p114
        %p427 = pneg %p111
        %s428 = sand.u32 %s30, 1
        %s429 = scalar_lea.sflag [#allocation9], %s428
        %s430 = sand.u32 %s129, 1
        %s431 = smul.addr %s430, 8
        %s432 = scalar_lea.vmem [#allocation8], %s431
        %p433 = pneg %p142
        %p434 = pneg %p139
        %s435 = sand.u32 %s30, 1
        %s436 = scalar_lea.sflag [#allocation9], %s435
        %s437 = sand.u32 %s157, 1
        %s438 = smul.addr %s437, 512
        %s439 = scalar_lea.vmem [#allocation10], %s438
        %p440 = pneg %p170
        %p441 = pneg %p167
        %s442 = sand.u32 %s183, 1
        %s443 = scalar_lea.sflag [#allocation12], %s442
        %s444 = sand.u32 %s183, 1
        %s445 = scalar_lea.vmem [#allocation11], %s444
        %p446 = pneg %p196
        %p447 = pneg %p193
        %p448 = pneg %p222
        %p449 = pneg %p219
        %s450 = sand.u32 %s209, 1
        %s451 = scalar_lea.sflag [#allocation4], %s450
        %s452 = sand.u32 %s209, 1
        %s453 = smul.addr %s452, 8
        %s454 = scalar_lea.vmem [#allocation13], %s453
        %s455 = smul.u32 8, %s35
        %s456 = smul.u32 8, %s35
        %s457 = smul.u32 8, %s35
        %s458 = smul.u32 128, %s35
        %p460 = scmp.eq.s32.totalorder %s35, 0
        // Predicated region
        $region69: #{tpu_custom_call.1} parent=43 // pred_check
          %p461 = pneg %p460
        $region70: #{tpu_custom_call.1} parent=43 // pred_check_branch
          %463 = sbr.rel (%p461) target = $region72
        $region71: #{tpu_custom_call.1} parent=43 // pred_region
          %v464 = vld [vmem:[%s407] sm:$0x1]
          %v466 = vlaneseq
          %v467 = vshrl.u32 %v466, 7
          %v468 = vsub.s32 0, %v467
          %v469 = vrot.slane %v464, %v468
          %471 = vst [vmem:[%s454] sm:$0xff] %v469
        $region72: #{tpu_custom_call.1} parent=43 // pred_fallthru
          _
        %v472 = vld [vmem:[#allocation2] sm:$0xff]
        %v473 = vld [vmem:[#allocation2 + $0x8] sm:$0xff]
        %v474 = vld [vmem:[%s372] sm:$0xff]
        %v475 = vld [vmem:[%s372 + $0x8] sm:$0xff]
        %v476 = vld [vmem:[%s372 + $0x10] sm:$0xff]
        %v477 = vld [vmem:[%s372 + $0x18] sm:$0xff]
        %v478 = vld [vmem:[%s372 + $0x20] sm:$0xff]
        %v479 = vld [vmem:[%s372 + $0x28] sm:$0xff]
        %v480 = vld [vmem:[%s372 + $0x30] sm:$0xff]
        %v481 = vld [vmem:[%s372 + $0x38] sm:$0xff]
        %v482 = vld [vmem:[%s372 + $0x40] sm:$0xff]
        %v483 = vld [vmem:[%s372 + $0x48] sm:$0xff]
        %v484 = vld [vmem:[%s372 + $0x50] sm:$0xff]
        %v485 = vld [vmem:[%s372 + $0x58] sm:$0xff]
        %v486 = vld [vmem:[%s372 + $0x60] sm:$0xff]
        %v487 = vld [vmem:[%s372 + $0x68] sm:$0xff]
        %v488 = vld [vmem:[%s372 + $0x70] sm:$0xff]
        %v489 = vld [vmem:[%s372 + $0x78] sm:$0xff]
        %v490 = vld [vmem:[%s372 + $0x80] sm:$0xff]
        %v491 = vld [vmem:[%s372 + $0x88] sm:$0xff]
        %v492 = vld [vmem:[%s372 + $0x90] sm:$0xff]
        %v493 = vld [vmem:[%s372 + $0x98] sm:$0xff]
        %v494 = vld [vmem:[%s372 + $0xa0] sm:$0xff]
        %v495 = vld [vmem:[%s372 + $0xa8] sm:$0xff]
        %v496 = vld [vmem:[%s372 + $0xb0] sm:$0xff]
        %v497 = vld [vmem:[%s372 + $0xb8] sm:$0xff]
        %v498 = vld [vmem:[%s372 + $0xc0] sm:$0xff]
        %v499 = vld [vmem:[%s372 + $0xc8] sm:$0xff]
        %v500 = vld [vmem:[%s372 + $0xd0] sm:$0xff]
        %v501 = vld [vmem:[%s372 + $0xd8] sm:$0xff]
        %v502 = vld [vmem:[%s372 + $0xe0] sm:$0xff]
        %v503 = vld [vmem:[%s372 + $0xe8] sm:$0xff]
        %v504 = vld [vmem:[%s372 + $0xf0] sm:$0xff]
        %v505 = vld [vmem:[%s372 + $0xf8] sm:$0xff]
        %v506 = vld [vmem:[%s372 + $0x100] sm:$0xff]
        %v507 = vld [vmem:[%s372 + $0x108] sm:$0xff]
        %v508 = vld [vmem:[%s372 + $0x110] sm:$0xff]
        %v509 = vld [vmem:[%s372 + $0x118] sm:$0xff]
        %v510 = vld [vmem:[%s372 + $0x120] sm:$0xff]
        %v511 = vld [vmem:[%s372 + $0x128] sm:$0xff]
        %v512 = vld [vmem:[%s372 + $0x130] sm:$0xff]
        %v513 = vld [vmem:[%s372 + $0x138] sm:$0xff]
        %v514 = vld [vmem:[%s372 + $0x140] sm:$0xff]
        %v515 = vld [vmem:[%s372 + $0x148] sm:$0xff]
        %v516 = vld [vmem:[%s372 + $0x150] sm:$0xff]
        %v517 = vld [vmem:[%s372 + $0x158] sm:$0xff]
        %v518 = vld [vmem:[%s372 + $0x160] sm:$0xff]
        %v519 = vld [vmem:[%s372 + $0x168] sm:$0xff]
        %v520 = vld [vmem:[%s372 + $0x170] sm:$0xff]
        %v521 = vld [vmem:[%s372 + $0x178] sm:$0xff]
        %v522 = vld [vmem:[%s372 + $0x180] sm:$0xff]
        %v523 = vld [vmem:[%s372 + $0x188] sm:$0xff]
        %v524 = vld [vmem:[%s372 + $0x190] sm:$0xff]
        %v525 = vld [vmem:[%s372 + $0x198] sm:$0xff]
        %v526 = vld [vmem:[%s372 + $0x1a0] sm:$0xff]
        %v527 = vld [vmem:[%s372 + $0x1a8] sm:$0xff]
        %v528 = vld [vmem:[%s372 + $0x1b0] sm:$0xff]
        %v529 = vld [vmem:[%s372 + $0x1b8] sm:$0xff]
        %v530 = vld [vmem:[%s372 + $0x1c0] sm:$0xff]
        %v531 = vld [vmem:[%s372 + $0x1c8] sm:$0xff]
        %v532 = vld [vmem:[%s372 + $0x1d0] sm:$0xff]
        %v533 = vld [vmem:[%s372 + $0x1d8] sm:$0xff]
        %v534 = vld [vmem:[%s372 + $0x1e0] sm:$0xff]
        %v535 = vld [vmem:[%s372 + $0x1e8] sm:$0xff]
        %v536 = vld [vmem:[%s372 + $0x1f0] sm:$0xff]
        %v537 = vld [vmem:[%s372 + $0x1f8] sm:$0xff]
        %v538 = vld [vmem:[%s372 + $0x200] sm:$0xff]
        %v539 = vld [vmem:[%s372 + $0x208] sm:$0xff]
        %v540 = vld [vmem:[%s372 + $0x210] sm:$0xff]
        %v541 = vld [vmem:[%s372 + $0x218] sm:$0xff]
        %v542 = vld [vmem:[%s372 + $0x220] sm:$0xff]
        %v543 = vld [vmem:[%s372 + $0x228] sm:$0xff]
        %v544 = vld [vmem:[%s372 + $0x230] sm:$0xff]
        %v545 = vld [vmem:[%s372 + $0x238] sm:$0xff]
        %v546 = vld [vmem:[%s372 + $0x240] sm:$0xff]
        %v547 = vld [vmem:[%s372 + $0x248] sm:$0xff]
        %v548 = vld [vmem:[%s372 + $0x250] sm:$0xff]
        %v549 = vld [vmem:[%s372 + $0x258] sm:$0xff]
        %v550 = vld [vmem:[%s372 + $0x260] sm:$0xff]
        %v551 = vld [vmem:[%s372 + $0x268] sm:$0xff]
        %v552 = vld [vmem:[%s372 + $0x270] sm:$0xff]
        %v553 = vld [vmem:[%s372 + $0x278] sm:$0xff]
        %v554 = vld [vmem:[%s372 + $0x280] sm:$0xff]
        %v555 = vld [vmem:[%s372 + $0x288] sm:$0xff]
        %v556 = vld [vmem:[%s372 + $0x290] sm:$0xff]
        %v557 = vld [vmem:[%s372 + $0x298] sm:$0xff]
        %v558 = vld [vmem:[%s372 + $0x2a0] sm:$0xff]
        %v559 = vld [vmem:[%s372 + $0x2a8] sm:$0xff]
        %v560 = vld [vmem:[%s372 + $0x2b0] sm:$0xff]
        %v561 = vld [vmem:[%s372 + $0x2b8] sm:$0xff]
        %v562 = vld [vmem:[%s372 + $0x2c0] sm:$0xff]
        %v563 = vld [vmem:[%s372 + $0x2c8] sm:$0xff]
        %v564 = vld [vmem:[%s372 + $0x2d0] sm:$0xff]
        %v565 = vld [vmem:[%s372 + $0x2d8] sm:$0xff]
        %v566 = vld [vmem:[%s372 + $0x2e0] sm:$0xff]
        %v567 = vld [vmem:[%s372 + $0x2e8] sm:$0xff]
        %v568 = vld [vmem:[%s372 + $0x2f0] sm:$0xff]
        %v569 = vld [vmem:[%s372 + $0x2f8] sm:$0xff]
        %v570 = vld [vmem:[%s372 + $0x300] sm:$0xff]
        %v571 = vld [vmem:[%s372 + $0x308] sm:$0xff]
        %v572 = vld [vmem:[%s372 + $0x310] sm:$0xff]
        %v573 = vld [vmem:[%s372 + $0x318] sm:$0xff]
        %v574 = vld [vmem:[%s372 + $0x320] sm:$0xff]
        %v575 = vld [vmem:[%s372 + $0x328] sm:$0xff]
        %v576 = vld [vmem:[%s372 + $0x330] sm:$0xff]
        %v577 = vld [vmem:[%s372 + $0x338] sm:$0xff]
        %v578 = vld [vmem:[%s372 + $0x340] sm:$0xff]
        %v579 = vld [vmem:[%s372 + $0x348] sm:$0xff]
        %v580 = vld [vmem:[%s372 + $0x350] sm:$0xff]
        %v581 = vld [vmem:[%s372 + $0x358] sm:$0xff]
        %v582 = vld [vmem:[%s372 + $0x360] sm:$0xff]
        %v583 = vld [vmem:[%s372 + $0x368] sm:$0xff]
        %v584 = vld [vmem:[%s372 + $0x370] sm:$0xff]
        %v585 = vld [vmem:[%s372 + $0x378] sm:$0xff]
        %v586 = vld [vmem:[%s372 + $0x380] sm:$0xff]
        %v587 = vld [vmem:[%s372 + $0x388] sm:$0xff]
        %v588 = vld [vmem:[%s372 + $0x390] sm:$0xff]
        %v589 = vld [vmem:[%s372 + $0x398] sm:$0xff]
        %v590 = vld [vmem:[%s372 + $0x3a0] sm:$0xff]
        %v591 = vld [vmem:[%s372 + $0x3a8] sm:$0xff]
        %v592 = vld [vmem:[%s372 + $0x3b0] sm:$0xff]
        %v593 = vld [vmem:[%s372 + $0x3b8] sm:$0xff]
        %v594 = vld [vmem:[%s372 + $0x3c0] sm:$0xff]
        %v595 = vld [vmem:[%s372 + $0x3c8] sm:$0xff]
        %v596 = vld [vmem:[%s372 + $0x3d0] sm:$0xff]
        %v597 = vld [vmem:[%s372 + $0x3d8] sm:$0xff]
        %v598 = vld [vmem:[%s372 + $0x3e0] sm:$0xff]
        %v599 = vld [vmem:[%s372 + $0x3e8] sm:$0xff]
        %v600 = vld [vmem:[%s372 + $0x3f0] sm:$0xff]
        %v601 = vld [vmem:[%s372 + $0x3f8] sm:$0xff]
        %v602 = vld [vmem:[%s372 + $0x400] sm:$0xff]
        %v603 = vld [vmem:[%s372 + $0x408] sm:$0xff]
        %v604 = vld [vmem:[%s372 + $0x410] sm:$0xff]
        %v605 = vld [vmem:[%s372 + $0x418] sm:$0xff]
        %v606 = vld [vmem:[%s372 + $0x420] sm:$0xff]
        %v607 = vld [vmem:[%s372 + $0x428] sm:$0xff]
        %v608 = vld [vmem:[%s372 + $0x430] sm:$0xff]
        %v609 = vld [vmem:[%s372 + $0x438] sm:$0xff]
        %v610 = vld [vmem:[%s372 + $0x440] sm:$0xff]
        %v611 = vld [vmem:[%s372 + $0x448] sm:$0xff]
        %v612 = vld [vmem:[%s372 + $0x450] sm:$0xff]
        %v613 = vld [vmem:[%s372 + $0x458] sm:$0xff]
        %v614 = vld [vmem:[%s372 + $0x460] sm:$0xff]
        %v615 = vld [vmem:[%s372 + $0x468] sm:$0xff]
        %v616 = vld [vmem:[%s372 + $0x470] sm:$0xff]
        %v617 = vld [vmem:[%s372 + $0x478] sm:$0xff]
        %v618 = vld [vmem:[%s372 + $0x480] sm:$0xff]
        %v619 = vld [vmem:[%s372 + $0x488] sm:$0xff]
        %v620 = vld [vmem:[%s372 + $0x490] sm:$0xff]
        %v621 = vld [vmem:[%s372 + $0x498] sm:$0xff]
        %v622 = vld [vmem:[%s372 + $0x4a0] sm:$0xff]
        %v623 = vld [vmem:[%s372 + $0x4a8] sm:$0xff]
        %v624 = vld [vmem:[%s372 + $0x4b0] sm:$0xff]
        %v625 = vld [vmem:[%s372 + $0x4b8] sm:$0xff]
        %v626 = vld [vmem:[%s372 + $0x4c0] sm:$0xff]
        %v627 = vld [vmem:[%s372 + $0x4c8] sm:$0xff]
        %v628 = vld [vmem:[%s372 + $0x4d0] sm:$0xff]
        %v629 = vld [vmem:[%s372 + $0x4d8] sm:$0xff]
        %v630 = vld [vmem:[%s372 + $0x4e0] sm:$0xff]
        %v631 = vld [vmem:[%s372 + $0x4e8] sm:$0xff]
        %v632 = vld [vmem:[%s372 + $0x4f0] sm:$0xff]
        %v633 = vld [vmem:[%s372 + $0x4f8] sm:$0xff]
        %v634 = vld [vmem:[%s372 + $0x500] sm:$0xff]
        %v635 = vld [vmem:[%s372 + $0x508] sm:$0xff]
        %v636 = vld [vmem:[%s372 + $0x510] sm:$0xff]
        %v637 = vld [vmem:[%s372 + $0x518] sm:$0xff]
        %v638 = vld [vmem:[%s372 + $0x520] sm:$0xff]
        %v639 = vld [vmem:[%s372 + $0x528] sm:$0xff]
        %v640 = vld [vmem:[%s372 + $0x530] sm:$0xff]
        %v641 = vld [vmem:[%s372 + $0x538] sm:$0xff]
        %v642 = vld [vmem:[%s372 + $0x540] sm:$0xff]
        %v643 = vld [vmem:[%s372 + $0x548] sm:$0xff]
        %v644 = vld [vmem:[%s372 + $0x550] sm:$0xff]
        %v645 = vld [vmem:[%s372 + $0x558] sm:$0xff]
        %v646 = vld [vmem:[%s372 + $0x560] sm:$0xff]
        %v647 = vld [vmem:[%s372 + $0x568] sm:$0xff]
        %v648 = vld [vmem:[%s372 + $0x570] sm:$0xff]
        %v649 = vld [vmem:[%s372 + $0x578] sm:$0xff]
        %v650 = vld [vmem:[%s372 + $0x580] sm:$0xff]
        %v651 = vld [vmem:[%s372 + $0x588] sm:$0xff]
        %v652 = vld [vmem:[%s372 + $0x590] sm:$0xff]
        %v653 = vld [vmem:[%s372 + $0x598] sm:$0xff]
        %v654 = vld [vmem:[%s372 + $0x5a0] sm:$0xff]
        %v655 = vld [vmem:[%s372 + $0x5a8] sm:$0xff]
        %v656 = vld [vmem:[%s372 + $0x5b0] sm:$0xff]
        %v657 = vld [vmem:[%s372 + $0x5b8] sm:$0xff]
        %v658 = vld [vmem:[%s372 + $0x5c0] sm:$0xff]
        %v659 = vld [vmem:[%s372 + $0x5c8] sm:$0xff]
        %v660 = vld [vmem:[%s372 + $0x5d0] sm:$0xff]
        %v661 = vld [vmem:[%s372 + $0x5d8] sm:$0xff]
        %v662 = vld [vmem:[%s372 + $0x5e0] sm:$0xff]
        %v663 = vld [vmem:[%s372 + $0x5e8] sm:$0xff]
        %v664 = vld [vmem:[%s372 + $0x5f0] sm:$0xff]
        %v665 = vld [vmem:[%s372 + $0x5f8] sm:$0xff]
        %v666 = vld [vmem:[%s372 + $0x600] sm:$0xff]
        %v667 = vld [vmem:[%s372 + $0x608] sm:$0xff]
        %v668 = vld [vmem:[%s372 + $0x610] sm:$0xff]
        %v669 = vld [vmem:[%s372 + $0x618] sm:$0xff]
        %v670 = vld [vmem:[%s372 + $0x620] sm:$0xff]
        %v671 = vld [vmem:[%s372 + $0x628] sm:$0xff]
        %v672 = vld [vmem:[%s372 + $0x630] sm:$0xff]
        %v673 = vld [vmem:[%s372 + $0x638] sm:$0xff]
        %v674 = vld [vmem:[%s372 + $0x640] sm:$0xff]
        %v675 = vld [vmem:[%s372 + $0x648] sm:$0xff]
        %v676 = vld [vmem:[%s372 + $0x650] sm:$0xff]
        %v677 = vld [vmem:[%s372 + $0x658] sm:$0xff]
        %v678 = vld [vmem:[%s372 + $0x660] sm:$0xff]
        %v679 = vld [vmem:[%s372 + $0x668] sm:$0xff]
        %v680 = vld [vmem:[%s372 + $0x670] sm:$0xff]
        %v681 = vld [vmem:[%s372 + $0x678] sm:$0xff]
        %v682 = vld [vmem:[%s372 + $0x680] sm:$0xff]
        %v683 = vld [vmem:[%s372 + $0x688] sm:$0xff]
        %v684 = vld [vmem:[%s372 + $0x690] sm:$0xff]
        %v685 = vld [vmem:[%s372 + $0x698] sm:$0xff]
        %v686 = vld [vmem:[%s372 + $0x6a0] sm:$0xff]
        %v687 = vld [vmem:[%s372 + $0x6a8] sm:$0xff]
        %v688 = vld [vmem:[%s372 + $0x6b0] sm:$0xff]
        %v689 = vld [vmem:[%s372 + $0x6b8] sm:$0xff]
        %v690 = vld [vmem:[%s372 + $0x6c0] sm:$0xff]
        %v691 = vld [vmem:[%s372 + $0x6c8] sm:$0xff]
        %v692 = vld [vmem:[%s372 + $0x6d0] sm:$0xff]
        %v693 = vld [vmem:[%s372 + $0x6d8] sm:$0xff]
        %v694 = vld [vmem:[%s372 + $0x6e0] sm:$0xff]
        %v695 = vld [vmem:[%s372 + $0x6e8] sm:$0xff]
        %v696 = vld [vmem:[%s372 + $0x6f0] sm:$0xff]
        %v697 = vld [vmem:[%s372 + $0x6f8] sm:$0xff]
        %v698 = vld [vmem:[%s372 + $0x700] sm:$0xff]
        %v699 = vld [vmem:[%s372 + $0x708] sm:$0xff]
        %v700 = vld [vmem:[%s372 + $0x710] sm:$0xff]
        %v701 = vld [vmem:[%s372 + $0x718] sm:$0xff]
        %v702 = vld [vmem:[%s372 + $0x720] sm:$0xff]
        %v703 = vld [vmem:[%s372 + $0x728] sm:$0xff]
        %v704 = vld [vmem:[%s372 + $0x730] sm:$0xff]
        %v705 = vld [vmem:[%s372 + $0x738] sm:$0xff]
        %v706 = vld [vmem:[%s372 + $0x740] sm:$0xff]
        %v707 = vld [vmem:[%s372 + $0x748] sm:$0xff]
        %v708 = vld [vmem:[%s372 + $0x750] sm:$0xff]
        %v709 = vld [vmem:[%s372 + $0x758] sm:$0xff]
        %v710 = vld [vmem:[%s372 + $0x760] sm:$0xff]
        %v711 = vld [vmem:[%s372 + $0x768] sm:$0xff]
        %v712 = vld [vmem:[%s372 + $0x770] sm:$0xff]
        %v713 = vld [vmem:[%s372 + $0x778] sm:$0xff]
        %v714 = vld [vmem:[%s372 + $0x780] sm:$0xff]
        %v715 = vld [vmem:[%s372 + $0x788] sm:$0xff]
        %v716 = vld [vmem:[%s372 + $0x790] sm:$0xff]
        %v717 = vld [vmem:[%s372 + $0x798] sm:$0xff]
        %v718 = vld [vmem:[%s372 + $0x7a0] sm:$0xff]
        %v719 = vld [vmem:[%s372 + $0x7a8] sm:$0xff]
        %v720 = vld [vmem:[%s372 + $0x7b0] sm:$0xff]
        %v721 = vld [vmem:[%s372 + $0x7b8] sm:$0xff]
        %v722 = vld [vmem:[%s372 + $0x7c0] sm:$0xff]
        %v723 = vld [vmem:[%s372 + $0x7c8] sm:$0xff]
        %v724 = vld [vmem:[%s372 + $0x7d0] sm:$0xff]
        %v725 = vld [vmem:[%s372 + $0x7d8] sm:$0xff]
        %v726 = vld [vmem:[%s372 + $0x7e0] sm:$0xff]
        %v727 = vld [vmem:[%s372 + $0x7e8] sm:$0xff]
        %v728 = vld [vmem:[%s372 + $0x7f0] sm:$0xff]
        %v729 = vld [vmem:[%s372 + $0x7f8] sm:$0xff]
        %v732 = vunpack.c.l.b16 %v472
        %v733 = vunpack.c.h.b16 %v472
        %v734 = vunpack.c.l.b16 %v473
        %v735 = vunpack.c.h.b16 %v473
        %v736 = vpack.c.b16 %v732, %v732
        %v737 = vpack.c.b16 %v733, %v733
        %v738 = vpack.c.b16 %v734, %v734
        %v739 = vpack.c.b16 %v735, %v735
        %v1000 = vunpack.c.l.b16 %v474
        %v1001 = vunpack.c.h.b16 %v474
        %v1002 = vunpack.c.l.b16 %v475
        %v1003 = vunpack.c.h.b16 %v475
        %v1004 = vunpack.c.l.b16 %v476
        %v1005 = vunpack.c.h.b16 %v476
        %v1006 = vunpack.c.l.b16 %v477
        %v1007 = vunpack.c.h.b16 %v477
        %v1008 = vunpack.c.l.b16 %v478
        %v1009 = vunpack.c.h.b16 %v478
        %v1010 = vunpack.c.l.b16 %v479
        %v1011 = vunpack.c.h.b16 %v479
        %v1012 = vunpack.c.l.b16 %v480
        %v1013 = vunpack.c.h.b16 %v480
        %v1014 = vunpack.c.l.b16 %v481
        %v1015 = vunpack.c.h.b16 %v481
        %v1016 = vunpack.c.l.b16 %v482
        %v1017 = vunpack.c.h.b16 %v482
        %v1018 = vunpack.c.l.b16 %v483
        %v1019 = vunpack.c.h.b16 %v483
        %v1020 = vunpack.c.l.b16 %v484
        %v1021 = vunpack.c.h.b16 %v484
        %v1022 = vunpack.c.l.b16 %v485
        %v1023 = vunpack.c.h.b16 %v485
        %v1024 = vunpack.c.l.b16 %v486
        %v1025 = vunpack.c.h.b16 %v486
        %v1026 = vunpack.c.l.b16 %v487
        %v1027 = vunpack.c.h.b16 %v487
        %v1028 = vunpack.c.l.b16 %v488
        %v1029 = vunpack.c.h.b16 %v488
        %v1030 = vunpack.c.l.b16 %v489
        %v1031 = vunpack.c.h.b16 %v489
        %v1032 = vunpack.c.l.b16 %v490
        %v1033 = vunpack.c.h.b16 %v490
        %v1034 = vunpack.c.l.b16 %v491
        %v1035 = vunpack.c.h.b16 %v491
        %v1036 = vunpack.c.l.b16 %v492
        %v1037 = vunpack.c.h.b16 %v492
        %v1038 = vunpack.c.l.b16 %v493
        %v1039 = vunpack.c.h.b16 %v493
        %v1040 = vunpack.c.l.b16 %v494
        %v1041 = vunpack.c.h.b16 %v494
        %v1042 = vunpack.c.l.b16 %v495
        %v1043 = vunpack.c.h.b16 %v495
        %v1044 = vunpack.c.l.b16 %v496
        %v1045 = vunpack.c.h.b16 %v496
        %v1046 = vunpack.c.l.b16 %v497
        %v1047 = vunpack.c.h.b16 %v497
        %v1048 = vunpack.c.l.b16 %v498
        %v1049 = vunpack.c.h.b16 %v498
        %v1050 = vunpack.c.l.b16 %v499
        %v1051 = vunpack.c.h.b16 %v499
        %v1052 = vunpack.c.l.b16 %v500
        %v1053 = vunpack.c.h.b16 %v500
        %v1054 = vunpack.c.l.b16 %v501
        %v1055 = vunpack.c.h.b16 %v501
        %v1056 = vunpack.c.l.b16 %v502
        %v1057 = vunpack.c.h.b16 %v502
        %v1058 = vunpack.c.l.b16 %v503
        %v1059 = vunpack.c.h.b16 %v503
        %v1060 = vunpack.c.l.b16 %v504
        %v1061 = vunpack.c.h.b16 %v504
        %v1062 = vunpack.c.l.b16 %v505
        %v1063 = vunpack.c.h.b16 %v505
        %v1064 = vunpack.c.l.b16 %v506
        %v1065 = vunpack.c.h.b16 %v506
        %v1066 = vunpack.c.l.b16 %v507
        %v1067 = vunpack.c.h.b16 %v507
        %v1068 = vunpack.c.l.b16 %v508
        %v1069 = vunpack.c.h.b16 %v508
        %v1070 = vunpack.c.l.b16 %v509
        %v1071 = vunpack.c.h.b16 %v509
        %v1072 = vunpack.c.l.b16 %v510
        %v1073 = vunpack.c.h.b16 %v510
        %v1074 = vunpack.c.l.b16 %v511
        %v1075 = vunpack.c.h.b16 %v511
        %v1076 = vunpack.c.l.b16 %v512
        %v1077 = vunpack.c.h.b16 %v512
        %v1078 = vunpack.c.l.b16 %v513
        %v1079 = vunpack.c.h.b16 %v513
        %v1080 = vunpack.c.l.b16 %v514
        %v1081 = vunpack.c.h.b16 %v514
        %v1082 = vunpack.c.l.b16 %v515
        %v1083 = vunpack.c.h.b16 %v515
        %v1084 = vunpack.c.l.b16 %v516
        %v1085 = vunpack.c.h.b16 %v516
        %v1086 = vunpack.c.l.b16 %v517
        %v1087 = vunpack.c.h.b16 %v517
        %v1088 = vunpack.c.l.b16 %v518
        %v1089 = vunpack.c.h.b16 %v518
        %v1090 = vunpack.c.l.b16 %v519
        %v1091 = vunpack.c.h.b16 %v519
        %v1092 = vunpack.c.l.b16 %v520
        %v1093 = vunpack.c.h.b16 %v520
        %v1094 = vunpack.c.l.b16 %v521
        %v1095 = vunpack.c.h.b16 %v521
        %v1096 = vunpack.c.l.b16 %v522
        %v1097 = vunpack.c.h.b16 %v522
        %v1098 = vunpack.c.l.b16 %v523
        %v1099 = vunpack.c.h.b16 %v523
        %v1100 = vunpack.c.l.b16 %v524
        %v1101 = vunpack.c.h.b16 %v524
        %v1102 = vunpack.c.l.b16 %v525
        %v1103 = vunpack.c.h.b16 %v525
        %v1104 = vunpack.c.l.b16 %v526
        %v1105 = vunpack.c.h.b16 %v526
        %v1106 = vunpack.c.l.b16 %v527
        %v1107 = vunpack.c.h.b16 %v527
        %v1108 = vunpack.c.l.b16 %v528
        %v1109 = vunpack.c.h.b16 %v528
        %v1110 = vunpack.c.l.b16 %v529
        %v1111 = vunpack.c.h.b16 %v529
        %v1112 = vunpack.c.l.b16 %v530
        %v1113 = vunpack.c.h.b16 %v530
        %v1114 = vunpack.c.l.b16 %v531
        %v1115 = vunpack.c.h.b16 %v531
        %v1116 = vunpack.c.l.b16 %v532
        %v1117 = vunpack.c.h.b16 %v532
        %v1118 = vunpack.c.l.b16 %v533
        %v1119 = vunpack.c.h.b16 %v533
        %v1120 = vunpack.c.l.b16 %v534
        %v1121 = vunpack.c.h.b16 %v534
        %v1122 = vunpack.c.l.b16 %v535
        %v1123 = vunpack.c.h.b16 %v535
        %v1124 = vunpack.c.l.b16 %v536
        %v1125 = vunpack.c.h.b16 %v536
        %v1126 = vunpack.c.l.b16 %v537
        %v1127 = vunpack.c.h.b16 %v537
        %v1128 = vunpack.c.l.b16 %v538
        %v1129 = vunpack.c.h.b16 %v538
        %v1130 = vunpack.c.l.b16 %v539
        %v1131 = vunpack.c.h.b16 %v539
        %v1132 = vunpack.c.l.b16 %v540
        %v1133 = vunpack.c.h.b16 %v540
        %v1134 = vunpack.c.l.b16 %v541
        %v1135 = vunpack.c.h.b16 %v541
        %v1136 = vunpack.c.l.b16 %v542
        %v1137 = vunpack.c.h.b16 %v542
        %v1138 = vunpack.c.l.b16 %v543
        %v1139 = vunpack.c.h.b16 %v543
        %v1140 = vunpack.c.l.b16 %v544
        %v1141 = vunpack.c.h.b16 %v544
        %v1142 = vunpack.c.l.b16 %v545
        %v1143 = vunpack.c.h.b16 %v545
        %v1144 = vunpack.c.l.b16 %v546
        %v1145 = vunpack.c.h.b16 %v546
        %v1146 = vunpack.c.l.b16 %v547
        %v1147 = vunpack.c.h.b16 %v547
        %v1148 = vunpack.c.l.b16 %v548
        %v1149 = vunpack.c.h.b16 %v548
        %v1150 = vunpack.c.l.b16 %v549
        %v1151 = vunpack.c.h.b16 %v549
        %v1152 = vunpack.c.l.b16 %v550
        %v1153 = vunpack.c.h.b16 %v550
        %v1154 = vunpack.c.l.b16 %v551
        %v1155 = vunpack.c.h.b16 %v551
        %v1156 = vunpack.c.l.b16 %v552
        %v1157 = vunpack.c.h.b16 %v552
        %v1158 = vunpack.c.l.b16 %v553
        %v1159 = vunpack.c.h.b16 %v553
        %v1160 = vunpack.c.l.b16 %v554
        %v1161 = vunpack.c.h.b16 %v554
        %v1162 = vunpack.c.l.b16 %v555
        %v1163 = vunpack.c.h.b16 %v555
        %v1164 = vunpack.c.l.b16 %v556
        %v1165 = vunpack.c.h.b16 %v556
        %v1166 = vunpack.c.l.b16 %v557
        %v1167 = vunpack.c.h.b16 %v557
        %v1168 = vunpack.c.l.b16 %v558
        %v1169 = vunpack.c.h.b16 %v558
        %v1170 = vunpack.c.l.b16 %v559
        %v1171 = vunpack.c.h.b16 %v559
        %v1172 = vunpack.c.l.b16 %v560
        %v1173 = vunpack.c.h.b16 %v560
        %v1174 = vunpack.c.l.b16 %v561
        %v1175 = vunpack.c.h.b16 %v561
        %v1176 = vunpack.c.l.b16 %v562
        %v1177 = vunpack.c.h.b16 %v562
        %v1178 = vunpack.c.l.b16 %v563
        %v1179 = vunpack.c.h.b16 %v563
        %v1180 = vunpack.c.l.b16 %v564
        %v1181 = vunpack.c.h.b16 %v564
        %v1182 = vunpack.c.l.b16 %v565
        %v1183 = vunpack.c.h.b16 %v565
        %v1184 = vunpack.c.l.b16 %v566
        %v1185 = vunpack.c.h.b16 %v566
        %v1186 = vunpack.c.l.b16 %v567
        %v1187 = vunpack.c.h.b16 %v567
        %v1188 = vunpack.c.l.b16 %v568
        %v1189 = vunpack.c.h.b16 %v568
        %v1190 = vunpack.c.l.b16 %v569
        %v1191 = vunpack.c.h.b16 %v569
        %v1192 = vunpack.c.l.b16 %v570
        %v1193 = vunpack.c.h.b16 %v570
        %v1194 = vunpack.c.l.b16 %v571
        %v1195 = vunpack.c.h.b16 %v571
        %v1196 = vunpack.c.l.b16 %v572
        %v1197 = vunpack.c.h.b16 %v572
        %v1198 = vunpack.c.l.b16 %v573
        %v1199 = vunpack.c.h.b16 %v573
        %v1200 = vunpack.c.l.b16 %v574
        %v1201 = vunpack.c.h.b16 %v574
        %v1202 = vunpack.c.l.b16 %v575
        %v1203 = vunpack.c.h.b16 %v575
        %v1204 = vunpack.c.l.b16 %v576
        %v1205 = vunpack.c.h.b16 %v576
        %v1206 = vunpack.c.l.b16 %v577
        %v1207 = vunpack.c.h.b16 %v577
        %v1208 = vunpack.c.l.b16 %v578
        %v1209 = vunpack.c.h.b16 %v578
        %v1210 = vunpack.c.l.b16 %v579
        %v1211 = vunpack.c.h.b16 %v579
        %v1212 = vunpack.c.l.b16 %v580
        %v1213 = vunpack.c.h.b16 %v580
        %v1214 = vunpack.c.l.b16 %v581
        %v1215 = vunpack.c.h.b16 %v581
        %v1216 = vunpack.c.l.b16 %v582
        %v1217 = vunpack.c.h.b16 %v582
        %v1218 = vunpack.c.l.b16 %v583
        %v1219 = vunpack.c.h.b16 %v583
        %v1220 = vunpack.c.l.b16 %v584
        %v1221 = vunpack.c.h.b16 %v584
        %v1222 = vunpack.c.l.b16 %v585
        %v1223 = vunpack.c.h.b16 %v585
        %v1224 = vunpack.c.l.b16 %v586
        %v1225 = vunpack.c.h.b16 %v586
        %v1226 = vunpack.c.l.b16 %v587
        %v1227 = vunpack.c.h.b16 %v587
        %v1228 = vunpack.c.l.b16 %v588
        %v1229 = vunpack.c.h.b16 %v588
        %v1230 = vunpack.c.l.b16 %v589
        %v1231 = vunpack.c.h.b16 %v589
        %v1232 = vunpack.c.l.b16 %v590
        %v1233 = vunpack.c.h.b16 %v590
        %v1234 = vunpack.c.l.b16 %v591
        %v1235 = vunpack.c.h.b16 %v591
        %v1236 = vunpack.c.l.b16 %v592
        %v1237 = vunpack.c.h.b16 %v592
        %v1238 = vunpack.c.l.b16 %v593
        %v1239 = vunpack.c.h.b16 %v593
        %v1240 = vunpack.c.l.b16 %v594
        %v1241 = vunpack.c.h.b16 %v594
        %v1242 = vunpack.c.l.b16 %v595
        %v1243 = vunpack.c.h.b16 %v595
        %v1244 = vunpack.c.l.b16 %v596
        %v1245 = vunpack.c.h.b16 %v596
        %v1246 = vunpack.c.l.b16 %v597
        %v1247 = vunpack.c.h.b16 %v597
        %v1248 = vunpack.c.l.b16 %v598
        %v1249 = vunpack.c.h.b16 %v598
        %v1250 = vunpack.c.l.b16 %v599
        %v1251 = vunpack.c.h.b16 %v599
        %v1252 = vunpack.c.l.b16 %v600
        %v1253 = vunpack.c.h.b16 %v600
        %v1254 = vunpack.c.l.b16 %v601
        %v1255 = vunpack.c.h.b16 %v601
        %v1256 = vunpack.c.l.b16 %v602
        %v1257 = vunpack.c.h.b16 %v602
        %v1258 = vunpack.c.l.b16 %v603
        %v1259 = vunpack.c.h.b16 %v603
        %v1260 = vunpack.c.l.b16 %v604
        %v1261 = vunpack.c.h.b16 %v604
        %v1262 = vunpack.c.l.b16 %v605
        %v1263 = vunpack.c.h.b16 %v605
        %v1264 = vunpack.c.l.b16 %v606
        %v1265 = vunpack.c.h.b16 %v606
        %v1266 = vunpack.c.l.b16 %v607
        %v1267 = vunpack.c.h.b16 %v607
        %v1268 = vunpack.c.l.b16 %v608
        %v1269 = vunpack.c.h.b16 %v608
        %v1270 = vunpack.c.l.b16 %v609
        %v1271 = vunpack.c.h.b16 %v609
        %v1272 = vunpack.c.l.b16 %v610
        %v1273 = vunpack.c.h.b16 %v610
        %v1274 = vunpack.c.l.b16 %v611
        %v1275 = vunpack.c.h.b16 %v611
        %v1276 = vunpack.c.l.b16 %v612
        %v1277 = vunpack.c.h.b16 %v612
        %v1278 = vunpack.c.l.b16 %v613
        %v1279 = vunpack.c.h.b16 %v613
        %v1280 = vunpack.c.l.b16 %v614
        %v1281 = vunpack.c.h.b16 %v614
        %v1282 = vunpack.c.l.b16 %v615
        %v1283 = vunpack.c.h.b16 %v615
        %v1284 = vunpack.c.l.b16 %v616
        %v1285 = vunpack.c.h.b16 %v616
        %v1286 = vunpack.c.l.b16 %v617
        %v1287 = vunpack.c.h.b16 %v617
        %v1288 = vunpack.c.l.b16 %v618
        %v1289 = vunpack.c.h.b16 %v618
        %v1290 = vunpack.c.l.b16 %v619
        %v1291 = vunpack.c.h.b16 %v619
        %v1292 = vunpack.c.l.b16 %v620
        %v1293 = vunpack.c.h.b16 %v620
        %v1294 = vunpack.c.l.b16 %v621
        %v1295 = vunpack.c.h.b16 %v621
        %v1296 = vunpack.c.l.b16 %v622
        %v1297 = vunpack.c.h.b16 %v622
        %v1298 = vunpack.c.l.b16 %v623
        %v1299 = vunpack.c.h.b16 %v623
        %v1300 = vunpack.c.l.b16 %v624
        %v1301 = vunpack.c.h.b16 %v624
        %v1302 = vunpack.c.l.b16 %v625
        %v1303 = vunpack.c.h.b16 %v625
        %v1304 = vunpack.c.l.b16 %v626
        %v1305 = vunpack.c.h.b16 %v626
        %v1306 = vunpack.c.l.b16 %v627
        %v1307 = vunpack.c.h.b16 %v627
        %v1308 = vunpack.c.l.b16 %v628
        %v1309 = vunpack.c.h.b16 %v628
        %v1310 = vunpack.c.l.b16 %v629
        %v1311 = vunpack.c.h.b16 %v629
        %v1312 = vunpack.c.l.b16 %v630
        %v1313 = vunpack.c.h.b16 %v630
        %v1314 = vunpack.c.l.b16 %v631
        %v1315 = vunpack.c.h.b16 %v631
        %v1316 = vunpack.c.l.b16 %v632
        %v1317 = vunpack.c.h.b16 %v632
        %v1318 = vunpack.c.l.b16 %v633
        %v1319 = vunpack.c.h.b16 %v633
        %v1320 = vunpack.c.l.b16 %v634
        %v1321 = vunpack.c.h.b16 %v634
        %v1322 = vunpack.c.l.b16 %v635
        %v1323 = vunpack.c.h.b16 %v635
        %v1324 = vunpack.c.l.b16 %v636
        %v1325 = vunpack.c.h.b16 %v636
        %v1326 = vunpack.c.l.b16 %v637
        %v1327 = vunpack.c.h.b16 %v637
        %v1328 = vunpack.c.l.b16 %v638
        %v1329 = vunpack.c.h.b16 %v638
        %v1330 = vunpack.c.l.b16 %v639
        %v1331 = vunpack.c.h.b16 %v639
        %v1332 = vunpack.c.l.b16 %v640
        %v1333 = vunpack.c.h.b16 %v640
        %v1334 = vunpack.c.l.b16 %v641
        %v1335 = vunpack.c.h.b16 %v641
        %v1336 = vunpack.c.l.b16 %v642
        %v1337 = vunpack.c.h.b16 %v642
        %v1338 = vunpack.c.l.b16 %v643
        %v1339 = vunpack.c.h.b16 %v643
        %v1340 = vunpack.c.l.b16 %v644
        %v1341 = vunpack.c.h.b16 %v644
        %v1342 = vunpack.c.l.b16 %v645
        %v1343 = vunpack.c.h.b16 %v645
        %v1344 = vunpack.c.l.b16 %v646
        %v1345 = vunpack.c.h.b16 %v646
        %v1346 = vunpack.c.l.b16 %v647
        %v1347 = vunpack.c.h.b16 %v647
        %v1348 = vunpack.c.l.b16 %v648
        %v1349 = vunpack.c.h.b16 %v648
        %v1350 = vunpack.c.l.b16 %v649
        %v1351 = vunpack.c.h.b16 %v649
        %v1352 = vunpack.c.l.b16 %v650
        %v1353 = vunpack.c.h.b16 %v650
        %v1354 = vunpack.c.l.b16 %v651
        %v1355 = vunpack.c.h.b16 %v651
        %v1356 = vunpack.c.l.b16 %v652
        %v1357 = vunpack.c.h.b16 %v652
        %v1358 = vunpack.c.l.b16 %v653
        %v1359 = vunpack.c.h.b16 %v653
        %v1360 = vunpack.c.l.b16 %v654
        %v1361 = vunpack.c.h.b16 %v654
        %v1362 = vunpack.c.l.b16 %v655
        %v1363 = vunpack.c.h.b16 %v655
        %v1364 = vunpack.c.l.b16 %v656
        %v1365 = vunpack.c.h.b16 %v656
        %v1366 = vunpack.c.l.b16 %v657
        %v1367 = vunpack.c.h.b16 %v657
        %v1368 = vunpack.c.l.b16 %v658
        %v1369 = vunpack.c.h.b16 %v658
        %v1370 = vunpack.c.l.b16 %v659
        %v1371 = vunpack.c.h.b16 %v659
        %v1372 = vunpack.c.l.b16 %v660
        %v1373 = vunpack.c.h.b16 %v660
        %v1374 = vunpack.c.l.b16 %v661
        %v1375 = vunpack.c.h.b16 %v661
        %v1376 = vunpack.c.l.b16 %v662
        %v1377 = vunpack.c.h.b16 %v662
        %v1378 = vunpack.c.l.b16 %v663
        %v1379 = vunpack.c.h.b16 %v663
        %v1380 = vunpack.c.l.b16 %v664
        %v1381 = vunpack.c.h.b16 %v664
        %v1382 = vunpack.c.l.b16 %v665
        %v1383 = vunpack.c.h.b16 %v665
        %v1384 = vunpack.c.l.b16 %v666
        %v1385 = vunpack.c.h.b16 %v666
        %v1386 = vunpack.c.l.b16 %v667
        %v1387 = vunpack.c.h.b16 %v667
        %v1388 = vunpack.c.l.b16 %v668
        %v1389 = vunpack.c.h.b16 %v668
        %v1390 = vunpack.c.l.b16 %v669
        %v1391 = vunpack.c.h.b16 %v669
        %v1392 = vunpack.c.l.b16 %v670
        %v1393 = vunpack.c.h.b16 %v670
        %v1394 = vunpack.c.l.b16 %v671
        %v1395 = vunpack.c.h.b16 %v671
        %v1396 = vunpack.c.l.b16 %v672
        %v1397 = vunpack.c.h.b16 %v672
        %v1398 = vunpack.c.l.b16 %v673
        %v1399 = vunpack.c.h.b16 %v673
        %v1400 = vunpack.c.l.b16 %v674
        %v1401 = vunpack.c.h.b16 %v674
        %v1402 = vunpack.c.l.b16 %v675
        %v1403 = vunpack.c.h.b16 %v675
        %v1404 = vunpack.c.l.b16 %v676
        %v1405 = vunpack.c.h.b16 %v676
        %v1406 = vunpack.c.l.b16 %v677
        %v1407 = vunpack.c.h.b16 %v677
        %v1408 = vunpack.c.l.b16 %v678
        %v1409 = vunpack.c.h.b16 %v678
        %v1410 = vunpack.c.l.b16 %v679
        %v1411 = vunpack.c.h.b16 %v679
        %v1412 = vunpack.c.l.b16 %v680
        %v1413 = vunpack.c.h.b16 %v680
        %v1414 = vunpack.c.l.b16 %v681
        %v1415 = vunpack.c.h.b16 %v681
        %v1416 = vunpack.c.l.b16 %v682
        %v1417 = vunpack.c.h.b16 %v682
        %v1418 = vunpack.c.l.b16 %v683
        %v1419 = vunpack.c.h.b16 %v683
        %v1420 = vunpack.c.l.b16 %v684
        %v1421 = vunpack.c.h.b16 %v684
        %v1422 = vunpack.c.l.b16 %v685
        %v1423 = vunpack.c.h.b16 %v685
        %v1424 = vunpack.c.l.b16 %v686
        %v1425 = vunpack.c.h.b16 %v686
        %v1426 = vunpack.c.l.b16 %v687
        %v1427 = vunpack.c.h.b16 %v687
        %v1428 = vunpack.c.l.b16 %v688
        %v1429 = vunpack.c.h.b16 %v688
        %v1430 = vunpack.c.l.b16 %v689
        %v1431 = vunpack.c.h.b16 %v689
        %v1432 = vunpack.c.l.b16 %v690
        %v1433 = vunpack.c.h.b16 %v690
        %v1434 = vunpack.c.l.b16 %v691
        %v1435 = vunpack.c.h.b16 %v691
        %v1436 = vunpack.c.l.b16 %v692
        %v1437 = vunpack.c.h.b16 %v692
        %v1438 = vunpack.c.l.b16 %v693
        %v1439 = vunpack.c.h.b16 %v693
        %v1440 = vunpack.c.l.b16 %v694
        %v1441 = vunpack.c.h.b16 %v694
        %v1442 = vunpack.c.l.b16 %v695
        %v1443 = vunpack.c.h.b16 %v695
        %v1444 = vunpack.c.l.b16 %v696
        %v1445 = vunpack.c.h.b16 %v696
        %v1446 = vunpack.c.l.b16 %v697
        %v1447 = vunpack.c.h.b16 %v697
        %v1448 = vunpack.c.l.b16 %v698
        %v1449 = vunpack.c.h.b16 %v698
        %v1450 = vunpack.c.l.b16 %v699
        %v1451 = vunpack.c.h.b16 %v699
        %v1452 = vunpack.c.l.b16 %v700
        %v1453 = vunpack.c.h.b16 %v700
        %v1454 = vunpack.c.l.b16 %v701
        %v1455 = vunpack.c.h.b16 %v701
        %v1456 = vunpack.c.l.b16 %v702
        %v1457 = vunpack.c.h.b16 %v702
        %v1458 = vunpack.c.l.b16 %v703
        %v1459 = vunpack.c.h.b16 %v703
        %v1460 = vunpack.c.l.b16 %v704
        %v1461 = vunpack.c.h.b16 %v704
        %v1462 = vunpack.c.l.b16 %v705
        %v1463 = vunpack.c.h.b16 %v705
        %v1464 = vunpack.c.l.b16 %v706
        %v1465 = vunpack.c.h.b16 %v706
        %v1466 = vunpack.c.l.b16 %v707
        %v1467 = vunpack.c.h.b16 %v707
        %v1468 = vunpack.c.l.b16 %v708
        %v1469 = vunpack.c.h.b16 %v708
        %v1470 = vunpack.c.l.b16 %v709
        %v1471 = vunpack.c.h.b16 %v709
        %v1472 = vunpack.c.l.b16 %v710
        %v1473 = vunpack.c.h.b16 %v710
        %v1474 = vunpack.c.l.b16 %v711
        %v1475 = vunpack.c.h.b16 %v711
        %v1476 = vunpack.c.l.b16 %v712
        %v1477 = vunpack.c.h.b16 %v712
        %v1478 = vunpack.c.l.b16 %v713
        %v1479 = vunpack.c.h.b16 %v713
        %v1480 = vunpack.c.l.b16 %v714
        %v1481 = vunpack.c.h.b16 %v714
        %v1482 = vunpack.c.l.b16 %v715
        %v1483 = vunpack.c.h.b16 %v715
        %v1484 = vunpack.c.l.b16 %v716
        %v1485 = vunpack.c.h.b16 %v716
        %v1486 = vunpack.c.l.b16 %v717
        %v1487 = vunpack.c.h.b16 %v717
        %v1488 = vunpack.c.l.b16 %v718
        %v1489 = vunpack.c.h.b16 %v718
        %v1490 = vunpack.c.l.b16 %v719
        %v1491 = vunpack.c.h.b16 %v719
        %v1492 = vunpack.c.l.b16 %v720
        %v1493 = vunpack.c.h.b16 %v720
        %v1494 = vunpack.c.l.b16 %v721
        %v1495 = vunpack.c.h.b16 %v721
        %v1496 = vunpack.c.l.b16 %v722
        %v1497 = vunpack.c.h.b16 %v722
        %v1498 = vunpack.c.l.b16 %v723
        %v1499 = vunpack.c.h.b16 %v723
        %v1500 = vunpack.c.l.b16 %v724
        %v1501 = vunpack.c.h.b16 %v724
        %v1502 = vunpack.c.l.b16 %v725
        %v1503 = vunpack.c.h.b16 %v725
        %v1504 = vunpack.c.l.b16 %v726
        %v1505 = vunpack.c.h.b16 %v726
        %v1506 = vunpack.c.l.b16 %v727
        %v1507 = vunpack.c.h.b16 %v727
        %v1508 = vunpack.c.l.b16 %v728
        %v1509 = vunpack.c.h.b16 %v728
        %v1510 = vunpack.c.l.b16 %v729
        %v1511 = vunpack.c.h.b16 %v729
        %v1512 = vpack.c.b16 %v1008, %v1000
        %v1513 = vpack.c.b16 %v1009, %v1001
        %v1514 = vpack.c.b16 %v1010, %v1002
        %v1515 = vpack.c.b16 %v1011, %v1003
        %v1516 = vpack.c.b16 %v1012, %v1004
        %v1517 = vpack.c.b16 %v1013, %v1005
        %v1518 = vpack.c.b16 %v1014, %v1006
        %v1519 = vpack.c.b16 %v1015, %v1007
        %v1520 = vpack.c.b16 %v1024, %v1016
        %v1521 = vpack.c.b16 %v1025, %v1017
        %v1522 = vpack.c.b16 %v1026, %v1018
        %v1523 = vpack.c.b16 %v1027, %v1019
        %v1524 = vpack.c.b16 %v1028, %v1020
        %v1525 = vpack.c.b16 %v1029, %v1021
        %v1526 = vpack.c.b16 %v1030, %v1022
        %v1527 = vpack.c.b16 %v1031, %v1023
        %v1528 = vpack.c.b16 %v1040, %v1032
        %v1529 = vpack.c.b16 %v1041, %v1033
        %v1530 = vpack.c.b16 %v1042, %v1034
        %v1531 = vpack.c.b16 %v1043, %v1035
        %v1532 = vpack.c.b16 %v1044, %v1036
        %v1533 = vpack.c.b16 %v1045, %v1037
        %v1534 = vpack.c.b16 %v1046, %v1038
        %v1535 = vpack.c.b16 %v1047, %v1039
        %v1536 = vpack.c.b16 %v1056, %v1048
        %v1537 = vpack.c.b16 %v1057, %v1049
        %v1538 = vpack.c.b16 %v1058, %v1050
        %v1539 = vpack.c.b16 %v1059, %v1051
        %v1540 = vpack.c.b16 %v1060, %v1052
        %v1541 = vpack.c.b16 %v1061, %v1053
        %v1542 = vpack.c.b16 %v1062, %v1054
        %v1543 = vpack.c.b16 %v1063, %v1055
        %v1544 = vpack.c.b16 %v1072, %v1064
        %v1545 = vpack.c.b16 %v1073, %v1065
        %v1546 = vpack.c.b16 %v1074, %v1066
        %v1547 = vpack.c.b16 %v1075, %v1067
        %v1548 = vpack.c.b16 %v1076, %v1068
        %v1549 = vpack.c.b16 %v1077, %v1069
        %v1550 = vpack.c.b16 %v1078, %v1070
        %v1551 = vpack.c.b16 %v1079, %v1071
        %v1552 = vpack.c.b16 %v1088, %v1080
        %v1553 = vpack.c.b16 %v1089, %v1081
        %v1554 = vpack.c.b16 %v1090, %v1082
        %v1555 = vpack.c.b16 %v1091, %v1083
        %v1556 = vpack.c.b16 %v1092, %v1084
        %v1557 = vpack.c.b16 %v1093, %v1085
        %v1558 = vpack.c.b16 %v1094, %v1086
        %v1559 = vpack.c.b16 %v1095, %v1087
        %v1560 = vpack.c.b16 %v1104, %v1096
        %v1561 = vpack.c.b16 %v1105, %v1097
        %v1562 = vpack.c.b16 %v1106, %v1098
        %v1563 = vpack.c.b16 %v1107, %v1099
        %v1564 = vpack.c.b16 %v1108, %v1100
        %v1565 = vpack.c.b16 %v1109, %v1101
        %v1566 = vpack.c.b16 %v1110, %v1102
        %v1567 = vpack.c.b16 %v1111, %v1103
        %v1568 = vpack.c.b16 %v1120, %v1112
        %v1569 = vpack.c.b16 %v1121, %v1113
        %v1570 = vpack.c.b16 %v1122, %v1114
        %v1571 = vpack.c.b16 %v1123, %v1115
        %v1572 = vpack.c.b16 %v1124, %v1116
        %v1573 = vpack.c.b16 %v1125, %v1117
        %v1574 = vpack.c.b16 %v1126, %v1118
        %v1575 = vpack.c.b16 %v1127, %v1119
        %v1576 = vpack.c.b16 %v1136, %v1128
        %v1577 = vpack.c.b16 %v1137, %v1129
        %v1578 = vpack.c.b16 %v1138, %v1130
        %v1579 = vpack.c.b16 %v1139, %v1131
        %v1580 = vpack.c.b16 %v1140, %v1132
        %v1581 = vpack.c.b16 %v1141, %v1133
        %v1582 = vpack.c.b16 %v1142, %v1134
        %v1583 = vpack.c.b16 %v1143, %v1135
        %v1584 = vpack.c.b16 %v1152, %v1144
        %v1585 = vpack.c.b16 %v1153, %v1145
        %v1586 = vpack.c.b16 %v1154, %v1146
        %v1587 = vpack.c.b16 %v1155, %v1147
        %v1588 = vpack.c.b16 %v1156, %v1148
        %v1589 = vpack.c.b16 %v1157, %v1149
        %v1590 = vpack.c.b16 %v1158, %v1150
        %v1591 = vpack.c.b16 %v1159, %v1151
        %v1592 = vpack.c.b16 %v1168, %v1160
        %v1593 = vpack.c.b16 %v1169, %v1161
        %v1594 = vpack.c.b16 %v1170, %v1162
        %v1595 = vpack.c.b16 %v1171, %v1163
        %v1596 = vpack.c.b16 %v1172, %v1164
        %v1597 = vpack.c.b16 %v1173, %v1165
        %v1598 = vpack.c.b16 %v1174, %v1166
        %v1599 = vpack.c.b16 %v1175, %v1167
        %v1600 = vpack.c.b16 %v1184, %v1176
        %v1601 = vpack.c.b16 %v1185, %v1177
        %v1602 = vpack.c.b16 %v1186, %v1178
        %v1603 = vpack.c.b16 %v1187, %v1179
        %v1604 = vpack.c.b16 %v1188, %v1180
        %v1605 = vpack.c.b16 %v1189, %v1181
        %v1606 = vpack.c.b16 %v1190, %v1182
        %v1607 = vpack.c.b16 %v1191, %v1183
        %v1608 = vpack.c.b16 %v1200, %v1192
        %v1609 = vpack.c.b16 %v1201, %v1193
        %v1610 = vpack.c.b16 %v1202, %v1194
        %v1611 = vpack.c.b16 %v1203, %v1195
        %v1612 = vpack.c.b16 %v1204, %v1196
        %v1613 = vpack.c.b16 %v1205, %v1197
        %v1614 = vpack.c.b16 %v1206, %v1198
        %v1615 = vpack.c.b16 %v1207, %v1199
        %v1616 = vpack.c.b16 %v1216, %v1208
        %v1617 = vpack.c.b16 %v1217, %v1209
        %v1618 = vpack.c.b16 %v1218, %v1210
        %v1619 = vpack.c.b16 %v1219, %v1211
        %v1620 = vpack.c.b16 %v1220, %v1212
        %v1621 = vpack.c.b16 %v1221, %v1213
        %v1622 = vpack.c.b16 %v1222, %v1214
        %v1623 = vpack.c.b16 %v1223, %v1215
        %v1624 = vpack.c.b16 %v1232, %v1224
        %v1625 = vpack.c.b16 %v1233, %v1225
        %v1626 = vpack.c.b16 %v1234, %v1226
        %v1627 = vpack.c.b16 %v1235, %v1227
        %v1628 = vpack.c.b16 %v1236, %v1228
        %v1629 = vpack.c.b16 %v1237, %v1229
        %v1630 = vpack.c.b16 %v1238, %v1230
        %v1631 = vpack.c.b16 %v1239, %v1231
        %v1632 = vpack.c.b16 %v1248, %v1240
        %v1633 = vpack.c.b16 %v1249, %v1241
        %v1634 = vpack.c.b16 %v1250, %v1242
        %v1635 = vpack.c.b16 %v1251, %v1243
        %v1636 = vpack.c.b16 %v1252, %v1244
        %v1637 = vpack.c.b16 %v1253, %v1245
        %v1638 = vpack.c.b16 %v1254, %v1246
        %v1639 = vpack.c.b16 %v1255, %v1247
        %v1640 = vpack.c.b16 %v1264, %v1256
        %v1641 = vpack.c.b16 %v1265, %v1257
        %v1642 = vpack.c.b16 %v1266, %v1258
        %v1643 = vpack.c.b16 %v1267, %v1259
        %v1644 = vpack.c.b16 %v1268, %v1260
        %v1645 = vpack.c.b16 %v1269, %v1261
        %v1646 = vpack.c.b16 %v1270, %v1262
        %v1647 = vpack.c.b16 %v1271, %v1263
        %v1648 = vpack.c.b16 %v1280, %v1272
        %v1649 = vpack.c.b16 %v1281, %v1273
        %v1650 = vpack.c.b16 %v1282, %v1274
        %v1651 = vpack.c.b16 %v1283, %v1275
        %v1652 = vpack.c.b16 %v1284, %v1276
        %v1653 = vpack.c.b16 %v1285, %v1277
        %v1654 = vpack.c.b16 %v1286, %v1278
        %v1655 = vpack.c.b16 %v1287, %v1279
        %v1656 = vpack.c.b16 %v1296, %v1288
        %v1657 = vpack.c.b16 %v1297, %v1289
        %v1658 = vpack.c.b16 %v1298, %v1290
        %v1659 = vpack.c.b16 %v1299, %v1291
        %v1660 = vpack.c.b16 %v1300, %v1292
        %v1661 = vpack.c.b16 %v1301, %v1293
        %v1662 = vpack.c.b16 %v1302, %v1294
        %v1663 = vpack.c.b16 %v1303, %v1295
        %v1664 = vpack.c.b16 %v1312, %v1304
        %v1665 = vpack.c.b16 %v1313, %v1305
        %v1666 = vpack.c.b16 %v1314, %v1306
        %v1667 = vpack.c.b16 %v1315, %v1307
        %v1668 = vpack.c.b16 %v1316, %v1308
        %v1669 = vpack.c.b16 %v1317, %v1309
        %v1670 = vpack.c.b16 %v1318, %v1310
        %v1671 = vpack.c.b16 %v1319, %v1311
        %v1672 = vpack.c.b16 %v1328, %v1320
        %v1673 = vpack.c.b16 %v1329, %v1321
        %v1674 = vpack.c.b16 %v1330, %v1322
        %v1675 = vpack.c.b16 %v1331, %v1323
        %v1676 = vpack.c.b16 %v1332, %v1324
        %v1677 = vpack.c.b16 %v1333, %v1325
        %v1678 = vpack.c.b16 %v1334, %v1326
        %v1679 = vpack.c.b16 %v1335, %v1327
        %v1680 = vpack.c.b16 %v1344, %v1336
        %v1681 = vpack.c.b16 %v1345, %v1337
        %v1682 = vpack.c.b16 %v1346, %v1338
        %v1683 = vpack.c.b16 %v1347, %v1339
        %v1684 = vpack.c.b16 %v1348, %v1340
        %v1685 = vpack.c.b16 %v1349, %v1341
        %v1686 = vpack.c.b16 %v1350, %v1342
        %v1687 = vpack.c.b16 %v1351, %v1343
        %v1688 = vpack.c.b16 %v1360, %v1352
        %v1689 = vpack.c.b16 %v1361, %v1353
        %v1690 = vpack.c.b16 %v1362, %v1354
        %v1691 = vpack.c.b16 %v1363, %v1355
        %v1692 = vpack.c.b16 %v1364, %v1356
        %v1693 = vpack.c.b16 %v1365, %v1357
        %v1694 = vpack.c.b16 %v1366, %v1358
        %v1695 = vpack.c.b16 %v1367, %v1359
        %v1696 = vpack.c.b16 %v1376, %v1368
        %v1697 = vpack.c.b16 %v1377, %v1369
        %v1698 = vpack.c.b16 %v1378, %v1370
        %v1699 = vpack.c.b16 %v1379, %v1371
        %v1700 = vpack.c.b16 %v1380, %v1372
        %v1701 = vpack.c.b16 %v1381, %v1373
        %v1702 = vpack.c.b16 %v1382, %v1374
        %v1703 = vpack.c.b16 %v1383, %v1375
        %v1704 = vpack.c.b16 %v1392, %v1384
        %v1705 = vpack.c.b16 %v1393, %v1385
        %v1706 = vpack.c.b16 %v1394, %v1386
        %v1707 = vpack.c.b16 %v1395, %v1387
        %v1708 = vpack.c.b16 %v1396, %v1388
        %v1709 = vpack.c.b16 %v1397, %v1389
        %v1710 = vpack.c.b16 %v1398, %v1390
        %v1711 = vpack.c.b16 %v1399, %v1391
        %v1712 = vpack.c.b16 %v1408, %v1400
        %v1713 = vpack.c.b16 %v1409, %v1401
        %v1714 = vpack.c.b16 %v1410, %v1402
        %v1715 = vpack.c.b16 %v1411, %v1403
        %v1716 = vpack.c.b16 %v1412, %v1404
        %v1717 = vpack.c.b16 %v1413, %v1405
        %v1718 = vpack.c.b16 %v1414, %v1406
        %v1719 = vpack.c.b16 %v1415, %v1407
        %v1720 = vpack.c.b16 %v1424, %v1416
        %v1721 = vpack.c.b16 %v1425, %v1417
        %v1722 = vpack.c.b16 %v1426, %v1418
        %v1723 = vpack.c.b16 %v1427, %v1419
        %v1724 = vpack.c.b16 %v1428, %v1420
        %v1725 = vpack.c.b16 %v1429, %v1421
        %v1726 = vpack.c.b16 %v1430, %v1422
        %v1727 = vpack.c.b16 %v1431, %v1423
        %v1728 = vpack.c.b16 %v1440, %v1432
        %v1729 = vpack.c.b16 %v1441, %v1433
        %v1730 = vpack.c.b16 %v1442, %v1434
        %v1731 = vpack.c.b16 %v1443, %v1435
        %v1732 = vpack.c.b16 %v1444, %v1436
        %v1733 = vpack.c.b16 %v1445, %v1437
        %v1734 = vpack.c.b16 %v1446, %v1438
        %v1735 = vpack.c.b16 %v1447, %v1439
        %v1736 = vpack.c.b16 %v1456, %v1448
        %v1737 = vpack.c.b16 %v1457, %v1449
        %v1738 = vpack.c.b16 %v1458, %v1450
        %v1739 = vpack.c.b16 %v1459, %v1451
        %v1740 = vpack.c.b16 %v1460, %v1452
        %v1741 = vpack.c.b16 %v1461, %v1453
        %v1742 = vpack.c.b16 %v1462, %v1454
        %v1743 = vpack.c.b16 %v1463, %v1455
        %v1744 = vpack.c.b16 %v1472, %v1464
        %v1745 = vpack.c.b16 %v1473, %v1465
        %v1746 = vpack.c.b16 %v1474, %v1466
        %v1747 = vpack.c.b16 %v1475, %v1467
        %v1748 = vpack.c.b16 %v1476, %v1468
        %v1749 = vpack.c.b16 %v1477, %v1469
        %v1750 = vpack.c.b16 %v1478, %v1470
        %v1751 = vpack.c.b16 %v1479, %v1471
        %v1752 = vpack.c.b16 %v1488, %v1480
        %v1753 = vpack.c.b16 %v1489, %v1481
        %v1754 = vpack.c.b16 %v1490, %v1482
        %v1755 = vpack.c.b16 %v1491, %v1483
        %v1756 = vpack.c.b16 %v1492, %v1484
        %v1757 = vpack.c.b16 %v1493, %v1485
        %v1758 = vpack.c.b16 %v1494, %v1486
        %v1759 = vpack.c.b16 %v1495, %v1487
        %v1760 = vpack.c.b16 %v1504, %v1496
        %v1761 = vpack.c.b16 %v1505, %v1497
        %v1762 = vpack.c.b16 %v1506, %v1498
        %v1763 = vpack.c.b16 %v1507, %v1499
        %v1764 = vpack.c.b16 %v1508, %v1500
        %v1765 = vpack.c.b16 %v1509, %v1501
        %v1766 = vpack.c.b16 %v1510, %v1502
        %v1767 = vpack.c.b16 %v1511, %v1503
        %2024 = vmatprep.subr.bf16.mxu0 %v1513
        %2025 = vmatpush1.bf16.msra.mxu0 %v1512
        %2026 = vmatprep.subr.bf16.mxu0 %v1521
        %2027 = vmatpush1.bf16.msra.mxu0 %v1520
        %2028 = vmatprep.subr.bf16.mxu0 %v1529
        %2029 = vmatpush1.bf16.msra.mxu0 %v1528
        %2030 = vmatprep.subr.bf16.mxu0 %v1537
        %2031 = vmatpush1.bf16.msra.mxu0 %v1536
        %2032 = vmatprep.subr.bf16.mxu0 %v1545
        %2033 = vmatpush1.bf16.msra.mxu0 %v1544
        %2034 = vmatprep.subr.bf16.mxu0 %v1553
        %2035 = vmatpush1.bf16.msra.mxu0 %v1552
        %2036 = vmatprep.subr.bf16.mxu0 %v1561
        %2037 = vmatpush1.bf16.msra.mxu0 %v1560
        %2038 = vmatprep.subr.bf16.mxu0 %v1569
        %2039 = vmatpush1.bf16.msra.mxu0 %v1568
        %2040 = vmatprep.subr.bf16.mxu0 %v1577
        %2041 = vmatpush1.bf16.msra.mxu0 %v1576
        %2042 = vmatprep.subr.bf16.mxu0 %v1585
        %2043 = vmatpush1.bf16.msra.mxu0 %v1584
        %2044 = vmatprep.subr.bf16.mxu0 %v1593
        %2045 = vmatpush1.bf16.msra.mxu0 %v1592
        %2046 = vmatprep.subr.bf16.mxu0 %v1601
        %2047 = vmatpush1.bf16.msra.mxu0 %v1600
        %2048 = vmatprep.subr.bf16.mxu0 %v1609
        %2049 = vmatpush1.bf16.msra.mxu0 %v1608
        %2050 = vmatprep.subr.bf16.mxu0 %v1617
        %2051 = vmatpush1.bf16.msra.mxu0 %v1616
        %2052 = vmatprep.subr.bf16.mxu0 %v1625
        %2053 = vmatpush1.bf16.msra.mxu0 %v1624
        %2054 = vmatprep.subr.bf16.mxu0 %v1633
        %2055 = vmatpush1.bf16.msra.mxu0 %v1632
        %2056 = vmatprep.mubr.bf16.mxu0 %v737
        %2057 = vmatmul.mubr.bf16.gmra.mrb[0].mxu0 %v736
        %v2058 = vpop.f32.mrb[0].mxu0
        %v2059 = vadd.f32 0.0, %v2058
        %v2060 = vpop.f32.mrb[0].mxu0
        %v2061 = vadd.f32 0.0, %v2060
        %v2062 = vpop.f32.mrb[0].mxu0
        %v2063 = vpop.f32.mrb[0].mxu0
        %2064 = vdwg.mxu0
        %2065 = vmatprep.subr.bf16.mxu0 %v1641
        %2066 = vmatpush1.bf16.msra.mxu0 %v1640
        %2067 = vmatprep.subr.bf16.mxu0 %v1649
        %2068 = vmatpush1.bf16.msra.mxu0 %v1648
        %2069 = vmatprep.subr.bf16.mxu0 %v1657
        %2070 = vmatpush1.bf16.msra.mxu0 %v1656
        %2071 = vmatprep.subr.bf16.mxu0 %v1665
        %2072 = vmatpush1.bf16.msra.mxu0 %v1664
        %2073 = vmatprep.subr.bf16.mxu0 %v1673
        %2074 = vmatpush1.bf16.msra.mxu0 %v1672
        %2075 = vmatprep.subr.bf16.mxu0 %v1681
        %2076 = vmatpush1.bf16.msra.mxu0 %v1680
        %2077 = vmatprep.subr.bf16.mxu0 %v1689
        %2078 = vmatpush1.bf16.msra.mxu0 %v1688
        %2079 = vmatprep.subr.bf16.mxu0 %v1697
        %2080 = vmatpush1.bf16.msra.mxu0 %v1696
        %2081 = vmatprep.subr.bf16.mxu0 %v1705
        %2082 = vmatpush1.bf16.msra.mxu0 %v1704
        %2083 = vmatprep.subr.bf16.mxu0 %v1713
        %2084 = vmatpush1.bf16.msra.mxu0 %v1712
        %2085 = vmatprep.subr.bf16.mxu0 %v1721
        %2086 = vmatpush1.bf16.msra.mxu0 %v1720
        %2087 = vmatprep.subr.bf16.mxu0 %v1729
        %2088 = vmatpush1.bf16.msra.mxu0 %v1728
        %2089 = vmatprep.subr.bf16.mxu0 %v1737
        %2090 = vmatpush1.bf16.msra.mxu0 %v1736
        %2091 = vmatprep.subr.bf16.mxu0 %v1745
        %2092 = vmatpush1.bf16.msra.mxu0 %v1744
        %2093 = vmatprep.subr.bf16.mxu0 %v1753
        %2094 = vmatpush1.bf16.msra.mxu0 %v1752
        %2095 = vmatprep.subr.bf16.mxu0 %v1761
        %2096 = vmatpush1.bf16.msra.mxu0 %v1760
        %2097 = vmatprep.mubr.bf16.mxu0 %v739
        %2098 = vmatmul.mubr.bf16.gmra.mrb[0].mxu0 %v738
        %v2099 = vpop.f32.mrb[0].mxu0
        %v2100 = vadd.f32 %v2059, %v2099
        %v2101 = vpop.f32.mrb[0].mxu0
        %v2102 = vadd.f32 %v2061, %v2101
        %v2103 = vpop.f32.mrb[0].mxu0
        %v2104 = vpop.f32.mrb[0].mxu0
        %2105 = vdwg.mxu0
        %2106 = vmatprep.subr.bf16.mxu0 %v1515
        %2107 = vmatpush1.bf16.msra.mxu0 %v1514
        %2108 = vmatprep.subr.bf16.mxu0 %v1523
        %2109 = vmatpush1.bf16.msra.mxu0 %v1522
        %2110 = vmatprep.subr.bf16.mxu0 %v1531
        %2111 = vmatpush1.bf16.msra.mxu0 %v1530
        %2112 = vmatprep.subr.bf16.mxu0 %v1539
        %2113 = vmatpush1.bf16.msra.mxu0 %v1538
        %2114 = vmatprep.subr.bf16.mxu0 %v1547
        %2115 = vmatpush1.bf16.msra.mxu0 %v1546
        %2116 = vmatprep.subr.bf16.mxu0 %v1555
        %2117 = vmatpush1.bf16.msra.mxu0 %v1554
        %2118 = vmatprep.subr.bf16.mxu0 %v1563
        %2119 = vmatpush1.bf16.msra.mxu0 %v1562
        %2120 = vmatprep.subr.bf16.mxu0 %v1571
        %2121 = vmatpush1.bf16.msra.mxu0 %v1570
        %2122 = vmatprep.subr.bf16.mxu0 %v1579
        %2123 = vmatpush1.bf16.msra.mxu0 %v1578
        %2124 = vmatprep.subr.bf16.mxu0 %v1587
        %2125 = vmatpush1.bf16.msra.mxu0 %v1586
        %2126 = vmatprep.subr.bf16.mxu0 %v1595
        %2127 = vmatpush1.bf16.msra.mxu0 %v1594
        %2128 = vmatprep.subr.bf16.mxu0 %v1603
        %2129 = vmatpush1.bf16.msra.mxu0 %v1602
        %2130 = vmatprep.subr.bf16.mxu0 %v1611
        %2131 = vmatpush1.bf16.msra.mxu0 %v1610
        %2132 = vmatprep.subr.bf16.mxu0 %v1619
        %2133 = vmatpush1.bf16.msra.mxu0 %v1618
        %2134 = vmatprep.subr.bf16.mxu0 %v1627
        %2135 = vmatpush1.bf16.msra.mxu0 %v1626
        %2136 = vmatprep.subr.bf16.mxu0 %v1635
        %2137 = vmatpush1.bf16.msra.mxu0 %v1634
        %2138 = vmatprep.mubr.bf16.mxu0 %v737
        %2139 = vmatmul.mubr.bf16.gmra.mrb[0].mxu0 %v736
        %v2140 = vpop.f32.mrb[0].mxu0
        %v2141 = vadd.f32 0.0, %v2140
        %v2142 = vpop.f32.mrb[0].mxu0
        %v2143 = vadd.f32 0.0, %v2142
        %v2144 = vpop.f32.mrb[0].mxu0
        %v2145 = vpop.f32.mrb[0].mxu0
        %2146 = vdwg.mxu0
        %2147 = vmatprep.subr.bf16.mxu0 %v1643
        %2148 = vmatpush1.bf16.msra.mxu0 %v1642
        %2149 = vmatprep.subr.bf16.mxu0 %v1651
        %2150 = vmatpush1.bf16.msra.mxu0 %v1650
        %2151 = vmatprep.subr.bf16.mxu0 %v1659
        %2152 = vmatpush1.bf16.msra.mxu0 %v1658
        %2153 = vmatprep.subr.bf16.mxu0 %v1667
        %2154 = vmatpush1.bf16.msra.mxu0 %v1666
        %2155 = vmatprep.subr.bf16.mxu0 %v1675
        %2156 = vmatpush1.bf16.msra.mxu0 %v1674
        %2157 = vmatprep.subr.bf16.mxu0 %v1683
        %2158 = vmatpush1.bf16.msra.mxu0 %v1682
        %2159 = vmatprep.subr.bf16.mxu0 %v1691
        %2160 = vmatpush1.bf16.msra.mxu0 %v1690
        %2161 = vmatprep.subr.bf16.mxu0 %v1699
        %2162 = vmatpush1.bf16.msra.mxu0 %v1698
        %2163 = vmatprep.subr.bf16.mxu0 %v1707
        %2164 = vmatpush1.bf16.msra.mxu0 %v1706
        %2165 = vmatprep.subr.bf16.mxu0 %v1715
        %2166 = vmatpush1.bf16.msra.mxu0 %v1714
        %2167 = vmatprep.subr.bf16.mxu0 %v1723
        %2168 = vmatpush1.bf16.msra.mxu0 %v1722
        %2169 = vmatprep.subr.bf16.mxu0 %v1731
        %2170 = vmatpush1.bf16.msra.mxu0 %v1730
        %2171 = vmatprep.subr.bf16.mxu0 %v1739
        %2172 = vmatpush1.bf16.msra.mxu0 %v1738
        %2173 = vmatprep.subr.bf16.mxu0 %v1747
        %2174 = vmatpush1.bf16.msra.mxu0 %v1746
        %2175 = vmatprep.subr.bf16.mxu0 %v1755
        %2176 = vmatpush1.bf16.msra.mxu0 %v1754
        %2177 = vmatprep.subr.bf16.mxu0 %v1763
        %2178 = vmatpush1.bf16.msra.mxu0 %v1762
        %2179 = vmatprep.mubr.bf16.mxu0 %v739
        %2180 = vmatmul.mubr.bf16.gmra.mrb[0].mxu0 %v738
        %v2181 = vpop.f32.mrb[0].mxu0
        %v2182 = vadd.f32 %v2141, %v2181
        %v2183 = vpop.f32.mrb[0].mxu0
        %v2184 = vadd.f32 %v2143, %v2183
        %v2185 = vpop.f32.mrb[0].mxu0
        %v2186 = vpop.f32.mrb[0].mxu0
        %2187 = vdwg.mxu0
        %2188 = vmatprep.subr.bf16.mxu0 %v1517
        %2189 = vmatpush1.bf16.msra.mxu0 %v1516
        %2190 = vmatprep.subr.bf16.mxu0 %v1525
        %2191 = vmatpush1.bf16.msra.mxu0 %v1524
        %2192 = vmatprep.subr.bf16.mxu0 %v1533
        %2193 = vmatpush1.bf16.msra.mxu0 %v1532
        %2194 = vmatprep.subr.bf16.mxu0 %v1541
        %2195 = vmatpush1.bf16.msra.mxu0 %v1540
        %2196 = vmatprep.subr.bf16.mxu0 %v1549
        %2197 = vmatpush1.bf16.msra.mxu0 %v1548
        %2198 = vmatprep.subr.bf16.mxu0 %v1557
        %2199 = vmatpush1.bf16.msra.mxu0 %v1556
        %2200 = vmatprep.subr.bf16.mxu0 %v1565
        %2201 = vmatpush1.bf16.msra.mxu0 %v1564
        %2202 = vmatprep.subr.bf16.mxu0 %v1573
        %2203 = vmatpush1.bf16.msra.mxu0 %v1572
        %2204 = vmatprep.subr.bf16.mxu0 %v1581
        %2205 = vmatpush1.bf16.msra.mxu0 %v1580
        %2206 = vmatprep.subr.bf16.mxu0 %v1589
        %2207 = vmatpush1.bf16.msra.mxu0 %v1588
        %2208 = vmatprep.subr.bf16.mxu0 %v1597
        %2209 = vmatpush1.bf16.msra.mxu0 %v1596
        %2210 = vmatprep.subr.bf16.mxu0 %v1605
        %2211 = vmatpush1.bf16.msra.mxu0 %v1604
        %2212 = vmatprep.subr.bf16.mxu0 %v1613
        %2213 = vmatpush1.bf16.msra.mxu0 %v1612
        %2214 = vmatprep.subr.bf16.mxu0 %v1621
        %2215 = vmatpush1.bf16.msra.mxu0 %v1620
        %2216 = vmatprep.subr.bf16.mxu0 %v1629
        %2217 = vmatpush1.bf16.msra.mxu0 %v1628
        %2218 = vmatprep.subr.bf16.mxu0 %v1637
        %2219 = vmatpush1.bf16.msra.mxu0 %v1636
        %2220 = vmatprep.mubr.bf16.mxu0 %v737
        %2221 = vmatmul.mubr.bf16.gmra.mrb[0].mxu0 %v736
        %v2222 = vpop.f32.mrb[0].mxu0
        %v2223 = vadd.f32 0.0, %v2222
        %v2224 = vpop.f32.mrb[0].mxu0
        %v2225 = vadd.f32 0.0, %v2224
        %v2226 = vpop.f32.mrb[0].mxu0
        %v2227 = vpop.f32.mrb[0].mxu0
        %2228 = vdwg.mxu0
        %2229 = vmatprep.subr.bf16.mxu0 %v1645
        %2230 = vmatpush1.bf16.msra.mxu0 %v1644
        %2231 = vmatprep.subr.bf16.mxu0 %v1653
        %2232 = vmatpush1.bf16.msra.mxu0 %v1652
        %2233 = vmatprep.subr.bf16.mxu0 %v1661
        %2234 = vmatpush1.bf16.msra.mxu0 %v1660
        %2235 = vmatprep.subr.bf16.mxu0 %v1669
        %2236 = vmatpush1.bf16.msra.mxu0 %v1668
        %2237 = vmatprep.subr.bf16.mxu0 %v1677
        %2238 = vmatpush1.bf16.msra.mxu0 %v1676
        %2239 = vmatprep.subr.bf16.mxu0 %v1685
        %2240 = vmatpush1.bf16.msra.mxu0 %v1684
        %2241 = vmatprep.subr.bf16.mxu0 %v1693
        %2242 = vmatpush1.bf16.msra.mxu0 %v1692
        %2243 = vmatprep.subr.bf16.mxu0 %v1701
        %2244 = vmatpush1.bf16.msra.mxu0 %v1700
        %2245 = vmatprep.subr.bf16.mxu0 %v1709
        %2246 = vmatpush1.bf16.msra.mxu0 %v1708
        %2247 = vmatprep.subr.bf16.mxu0 %v1717
        %2248 = vmatpush1.bf16.msra.mxu0 %v1716
        %2249 = vmatprep.subr.bf16.mxu0 %v1725
        %2250 = vmatpush1.bf16.msra.mxu0 %v1724
        %2251 = vmatprep.subr.bf16.mxu0 %v1733
        %2252 = vmatpush1.bf16.msra.mxu0 %v1732
        %2253 = vmatprep.subr.bf16.mxu0 %v1741
        %2254 = vmatpush1.bf16.msra.mxu0 %v1740
        %2255 = vmatprep.subr.bf16.mxu0 %v1749
        %2256 = vmatpush1.bf16.msra.mxu0 %v1748
        %2257 = vmatprep.subr.bf16.mxu0 %v1757
        %2258 = vmatpush1.bf16.msra.mxu0 %v1756
        %2259 = vmatprep.subr.bf16.mxu0 %v1765
        %2260 = vmatpush1.bf16.msra.mxu0 %v1764
        %2261 = vmatprep.mubr.bf16.mxu0 %v739
        %2262 = vmatmul.mubr.bf16.gmra.mrb[0].mxu0 %v738
        %v2263 = vpop.f32.mrb[0].mxu0
        %v2264 = vadd.f32 %v2223, %v2263
        %v2265 = vpop.f32.mrb[0].mxu0
        %v2266 = vadd.f32 %v2225, %v2265
        %v2267 = vpop.f32.mrb[0].mxu0
        %v2268 = vpop.f32.mrb[0].mxu0
        %2269 = vdwg.mxu0
        %2270 = vmatprep.subr.bf16.mxu0 %v1519
        %2271 = vmatpush1.bf16.msra.mxu0 %v1518
        %2272 = vmatprep.subr.bf16.mxu0 %v1527
        %2273 = vmatpush1.bf16.msra.mxu0 %v1526
        %2274 = vmatprep.subr.bf16.mxu0 %v1535
        %2275 = vmatpush1.bf16.msra.mxu0 %v1534
        %2276 = vmatprep.subr.bf16.mxu0 %v1543
        %2277 = vmatpush1.bf16.msra.mxu0 %v1542
        %2278 = vmatprep.subr.bf16.mxu0 %v1551
        %2279 = vmatpush1.bf16.msra.mxu0 %v1550
        %2280 = vmatprep.subr.bf16.mxu0 %v1559
        %2281 = vmatpush1.bf16.msra.mxu0 %v1558
        %2282 = vmatprep.subr.bf16.mxu0 %v1567
        %2283 = vmatpush1.bf16.msra.mxu0 %v1566
        %2284 = vmatprep.subr.bf16.mxu0 %v1575
        %2285 = vmatpush1.bf16.msra.mxu0 %v1574
        %2286 = vmatprep.subr.bf16.mxu0 %v1583
        %2287 = vmatpush1.bf16.msra.mxu0 %v1582
        %2288 = vmatprep.subr.bf16.mxu0 %v1591
        %2289 = vmatpush1.bf16.msra.mxu0 %v1590
        %2290 = vmatprep.subr.bf16.mxu0 %v1599
        %2291 = vmatpush1.bf16.msra.mxu0 %v1598
        %2292 = vmatprep.subr.bf16.mxu0 %v1607
        %2293 = vmatpush1.bf16.msra.mxu0 %v1606
        %2294 = vmatprep.subr.bf16.mxu0 %v1615
        %2295 = vmatpush1.bf16.msra.mxu0 %v1614
        %2296 = vmatprep.subr.bf16.mxu0 %v1623
        %2297 = vmatpush1.bf16.msra.mxu0 %v1622
        %2298 = vmatprep.subr.bf16.mxu0 %v1631
        %2299 = vmatpush1.bf16.msra.mxu0 %v1630
        %2300 = vmatprep.subr.bf16.mxu0 %v1639
        %2301 = vmatpush1.bf16.msra.mxu0 %v1638
        %2302 = vmatprep.mubr.bf16.mxu0 %v737
        %2303 = vmatmul.mubr.bf16.gmra.mrb[0].mxu0 %v736
        %v2304 = vpop.f32.mrb[0].mxu0
        %v2305 = vadd.f32 0.0, %v2304
        %v2306 = vpop.f32.mrb[0].mxu0
        %v2307 = vadd.f32 0.0, %v2306
        %v2308 = vpop.f32.mrb[0].mxu0
        %v2309 = vpop.f32.mrb[0].mxu0
        %2310 = vdwg.mxu0
        %2311 = vmatprep.subr.bf16.mxu0 %v1647
        %2312 = vmatpush1.bf16.msra.mxu0 %v1646
        %2313 = vmatprep.subr.bf16.mxu0 %v1655
        %2314 = vmatpush1.bf16.msra.mxu0 %v1654
        %2315 = vmatprep.subr.bf16.mxu0 %v1663
        %2316 = vmatpush1.bf16.msra.mxu0 %v1662
        %2317 = vmatprep.subr.bf16.mxu0 %v1671
        %2318 = vmatpush1.bf16.msra.mxu0 %v1670
        %2319 = vmatprep.subr.bf16.mxu0 %v1679
        %2320 = vmatpush1.bf16.msra.mxu0 %v1678
        %2321 = vmatprep.subr.bf16.mxu0 %v1687
        %2322 = vmatpush1.bf16.msra.mxu0 %v1686
        %2323 = vmatprep.subr.bf16.mxu0 %v1695
        %2324 = vmatpush1.bf16.msra.mxu0 %v1694
        %2325 = vmatprep.subr.bf16.mxu0 %v1703
        %2326 = vmatpush1.bf16.msra.mxu0 %v1702
        %2327 = vmatprep.subr.bf16.mxu0 %v1711
        %2328 = vmatpush1.bf16.msra.mxu0 %v1710
        %2329 = vmatprep.subr.bf16.mxu0 %v1719
        %2330 = vmatpush1.bf16.msra.mxu0 %v1718
        %2331 = vmatprep.subr.bf16.mxu0 %v1727
        %2332 = vmatpush1.bf16.msra.mxu0 %v1726
        %2333 = vmatprep.subr.bf16.mxu0 %v1735
        %2334 = vmatpush1.bf16.msra.mxu0 %v1734
        %2335 = vmatprep.subr.bf16.mxu0 %v1743
        %2336 = vmatpush1.bf16.msra.mxu0 %v1742
        %2337 = vmatprep.subr.bf16.mxu0 %v1751
        %2338 = vmatpush1.bf16.msra.mxu0 %v1750
        %2339 = vmatprep.subr.bf16.mxu0 %v1759
        %2340 = vmatpush1.bf16.msra.mxu0 %v1758
        %2341 = vmatprep.subr.bf16.mxu0 %v1767
        %2342 = vmatpush1.bf16.msra.mxu0 %v1766
        %2343 = vmatprep.mubr.bf16.mxu0 %v739
        %2344 = vmatmul.mubr.bf16.gmra.mrb[0].mxu0 %v738
        %v2345 = vpop.f32.mrb[0].mxu0
        %v2346 = vadd.f32 %v2305, %v2345
        %v2347 = vpop.f32.mrb[0].mxu0
        %v2348 = vadd.f32 %v2307, %v2347
        %v2349 = vpop.f32.mrb[0].mxu0
        %v2350 = vpop.f32.mrb[0].mxu0
        %2351 = vdwg.mxu0
        %v2352 = vrot.slane %v2100, 4
        %v2353 = vadd.f32 %v2100, %v2352
        %v2354 = vrot.slane %v2353, 2
        %v2355 = vadd.f32 %v2353, %v2354
        %v2356 = vrot.slane %v2355, 1
        %v2357 = vadd.f32 %v2355, %v2356
        %v2358 = vrot.slane %v2102, 4
        %v2359 = vadd.f32 %v2102, %v2358
        %v2360 = vrot.slane %v2359, 2
        %v2361 = vadd.f32 %v2359, %v2360
        %v2362 = vrot.slane %v2361, 1
        %v2363 = vadd.f32 %v2361, %v2362
        %v2364 = vrot.slane %v2182, 4
        %v2365 = vadd.f32 %v2182, %v2364
        %v2366 = vrot.slane %v2365, 2
        %v2367 = vadd.f32 %v2365, %v2366
        %v2368 = vrot.slane %v2367, 1
        %v2369 = vadd.f32 %v2367, %v2368
        %v2370 = vrot.slane %v2184, 4
        %v2371 = vadd.f32 %v2184, %v2370
        %v2372 = vrot.slane %v2371, 2
        %v2373 = vadd.f32 %v2371, %v2372
        %v2374 = vrot.slane %v2373, 1
        %v2375 = vadd.f32 %v2373, %v2374
        %v2376 = vrot.slane %v2264, 4
        %v2377 = vadd.f32 %v2264, %v2376
        %v2378 = vrot.slane %v2377, 2
        %v2379 = vadd.f32 %v2377, %v2378
        %v2380 = vrot.slane %v2379, 1
        %v2381 = vadd.f32 %v2379, %v2380
        %v2382 = vrot.slane %v2266, 4
        %v2383 = vadd.f32 %v2266, %v2382
        %v2384 = vrot.slane %v2383, 2
        %v2385 = vadd.f32 %v2383, %v2384
        %v2386 = vrot.slane %v2385, 1
        %v2387 = vadd.f32 %v2385, %v2386
        %v2388 = vrot.slane %v2346, 4
        %v2389 = vadd.f32 %v2346, %v2388
        %v2390 = vrot.slane %v2389, 2
        %v2391 = vadd.f32 %v2389, %v2390
        %v2392 = vrot.slane %v2391, 1
        %v2393 = vadd.f32 %v2391, %v2392
        %v2394 = vrot.slane %v2348, 4
        %v2395 = vadd.f32 %v2348, %v2394
        %v2396 = vrot.slane %v2395, 2
        %v2397 = vadd.f32 %v2395, %v2396
        %v2398 = vrot.slane %v2397, 1
        %v2399 = vadd.f32 %v2397, %v2398
        %v2400 = vmul.f32 %v2357, 0.125
        %v2401 = vmul.f32 %v2363, 0.125
        %v2402 = vmul.f32 %v2369, 0.125
        %v2403 = vmul.f32 %v2375, 0.125
        %v2404 = vmul.f32 %v2381, 0.125
        %v2405 = vmul.f32 %v2387, 0.125
        %v2406 = vmul.f32 %v2393, 0.125
        %v2407 = vmul.f32 %v2399, 0.125
        %v2408 = vsub.f32 %v2100, %v2400
        %v2409 = vsub.f32 %v2102, %v2401
        %v2410 = vsub.f32 %v2182, %v2402
        %v2411 = vsub.f32 %v2184, %v2403
        %v2412 = vsub.f32 %v2264, %v2404
        %v2413 = vsub.f32 %v2266, %v2405
        %v2414 = vsub.f32 %v2346, %v2406
        %v2415 = vsub.f32 %v2348, %v2407
        %v2416 = vmul.f32 %v2408, %v2408
        %v2417 = vmul.f32 %v2409, %v2409
        %v2418 = vmul.f32 %v2410, %v2410
        %v2419 = vmul.f32 %v2411, %v2411
        %v2420 = vmul.f32 %v2412, %v2412
        %v2421 = vmul.f32 %v2413, %v2413
        %v2422 = vmul.f32 %v2414, %v2414
        %v2423 = vmul.f32 %v2415, %v2415
        %v2424 = vrot.slane %v2416, 4
        %v2425 = vadd.f32 %v2416, %v2424
        %v2426 = vrot.slane %v2425, 2
        %v2427 = vadd.f32 %v2425, %v2426
        %v2428 = vrot.slane %v2427, 1
        %v2429 = vadd.f32 %v2427, %v2428
        %v2430 = vrot.slane %v2417, 4
        %v2431 = vadd.f32 %v2417, %v2430
        %v2432 = vrot.slane %v2431, 2
        %v2433 = vadd.f32 %v2431, %v2432
        %v2434 = vrot.slane %v2433, 1
        %v2435 = vadd.f32 %v2433, %v2434
        %v2436 = vrot.slane %v2418, 4
        %v2437 = vadd.f32 %v2418, %v2436
        %v2438 = vrot.slane %v2437, 2
        %v2439 = vadd.f32 %v2437, %v2438
        %v2440 = vrot.slane %v2439, 1
        %v2441 = vadd.f32 %v2439, %v2440
        %v2442 = vrot.slane %v2419, 4
        %v2443 = vadd.f32 %v2419, %v2442
        %v2444 = vrot.slane %v2443, 2
        %v2445 = vadd.f32 %v2443, %v2444
        %v2446 = vrot.slane %v2445, 1
        %v2447 = vadd.f32 %v2445, %v2446
        %v2448 = vrot.slane %v2420, 4
        %v2449 = vadd.f32 %v2420, %v2448
        %v2450 = vrot.slane %v2449, 2
        %v2451 = vadd.f32 %v2449, %v2450
        %v2452 = vrot.slane %v2451, 1
        %v2453 = vadd.f32 %v2451, %v2452
        %v2454 = vrot.slane %v2421, 4
        %v2455 = vadd.f32 %v2421, %v2454
        %v2456 = vrot.slane %v2455, 2
        %v2457 = vadd.f32 %v2455, %v2456
        %v2458 = vrot.slane %v2457, 1
        %v2459 = vadd.f32 %v2457, %v2458
        %v2460 = vrot.slane %v2422, 4
        %v2461 = vadd.f32 %v2422, %v2460
        %v2462 = vrot.slane %v2461, 2
        %v2463 = vadd.f32 %v2461, %v2462
        %v2464 = vrot.slane %v2463, 1
        %v2465 = vadd.f32 %v2463, %v2464
        %v2466 = vrot.slane %v2423, 4
        %v2467 = vadd.f32 %v2423, %v2466
        %v2468 = vrot.slane %v2467, 2
        %v2469 = vadd.f32 %v2467, %v2468
        %v2470 = vrot.slane %v2469, 1
        %v2471 = vadd.f32 %v2469, %v2470
        %v2472 = vmul.f32 %v2429, 0.125
        %v2473 = vmul.f32 %v2435, 0.125
        %v2474 = vmul.f32 %v2441, 0.125
        %v2475 = vmul.f32 %v2447, 0.125
        %v2476 = vmul.f32 %v2453, 0.125
        %v2477 = vmul.f32 %v2459, 0.125
        %v2478 = vmul.f32 %v2465, 0.125
        %v2479 = vmul.f32 %v2471, 0.125
        %v2480 = vld [vmem:[%s381] sm:$0xff]
        %v2481 = vadd.f32 %v2472, 1e-05
        %v2482 = vadd.f32 %v2473, 1e-05
        %v2483 = vadd.f32 %v2474, 1e-05
        %v2484 = vadd.f32 %v2475, 1e-05
        %v2485 = vadd.f32 %v2476, 1e-05
        %v2486 = vadd.f32 %v2477, 1e-05
        %v2487 = vadd.f32 %v2478, 1e-05
        %v2488 = vadd.f32 %v2479, 1e-05
        %v2489 = vrsqrt.pop %v2481
        %v2490 = vrsqrt.pop %v2482
        %v2491 = vrsqrt.pop %v2483
        %v2492 = vrsqrt.pop %v2484
        %v2493 = vrsqrt.pop %v2485
        %v2494 = vrsqrt.pop %v2486
        %v2495 = vrsqrt.pop %v2487
        %v2496 = vrsqrt.pop %v2488
        %v2505 = vcombine.low %v2489, %v2490
        %v2506 = vcombine.low %v2491, %v2492
        %v2507 = vcombine.low %v2493, %v2494
        %v2508 = vcombine.low %v2495, %v2496
        %v2510 = vunpack.c.l.s4 1966171168
        %v2511 = vunpack.c.0.s8 %v2510
        %v2512 = vlaneseq
        %v2513 = vshrl.u32 %v2512, 7
        %v2514 = vsub.s32 %v2511, %v2513
        %v2515 = vrot.slane %v2505, %v2514
        %v2517 = vunpack.c.l.s4 1966171168
        %v2518 = vunpack.c.0.s8 %v2517
        %v2519 = vlaneseq
        %v2520 = vshrl.u32 %v2519, 7
        %v2521 = vsub.s32 %v2518, %v2520
        %v2522 = vrot.slane %v2506, %v2521
        %v2524 = vunpack.c.l.s4 1966171168
        %v2525 = vunpack.c.0.s8 %v2524
        %v2526 = vlaneseq
        %v2527 = vshrl.u32 %v2526, 7
        %v2528 = vsub.s32 %v2525, %v2527
        %v2529 = vrot.slane %v2507, %v2528
        %v2531 = vunpack.c.l.s4 1966171168
        %v2532 = vunpack.c.0.s8 %v2531
        %v2533 = vlaneseq
        %v2534 = vshrl.u32 %v2533, 7
        %v2535 = vsub.s32 %v2532, %v2534
        %v2536 = vrot.slane %v2508, %v2535
        %v2537 = vcombine.low %v2515, %v2522
        %v2538 = vcombine.low %v2529, %v2536
        %v2540 = vunpack.c.l.s4 1966171168
        %v2541 = vunpack.c.0.s8 %v2540
        %v2542 = vlaneseq
        %v2543 = vshrl.u32 %v2542, 7
        %v2544 = vsub.s32 %v2541, %v2543
        %v2545 = vrot.slane %v2537, %v2544
        %v2547 = vunpack.c.l.s4 1966171168
        %v2548 = vunpack.c.0.s8 %v2547
        %v2549 = vlaneseq
        %v2550 = vshrl.u32 %v2549, 7
        %v2551 = vsub.s32 %v2548, %v2550
        %v2552 = vrot.slane %v2538, %v2551
        %v2553 = vcombine.low %v2545, %v2552
        %v2555 = vmul.f32 %v2480, %v2553
        %v2557 = vlaneseq
        %v2558 = vshrl.u32 %v2557, 7
        %v2559 = vsub.s32 0, %v2558
        %v2560 = vrot.slane %v2555, %v2559
        %v2561 = vlaneseq
        %v2562 = vshrl.u32 %v2561, 7
        %v2563 = vsub.s32 1, %v2562
        %v2564 = vrot.slane %v2555, %v2563
        %v2565 = vlaneseq
        %v2566 = vshrl.u32 %v2565, 7
        %v2567 = vsub.s32 2, %v2566
        %v2568 = vrot.slane %v2555, %v2567
        %v2569 = vlaneseq
        %v2570 = vshrl.u32 %v2569, 7
        %v2571 = vsub.s32 3, %v2570
        %v2572 = vrot.slane %v2555, %v2571
        %v2573 = vlaneseq
        %v2574 = vshrl.u32 %v2573, 7
        %v2575 = vsub.s32 4, %v2574
        %v2576 = vrot.slane %v2555, %v2575
        %v2577 = vlaneseq
        %v2578 = vshrl.u32 %v2577, 7
        %v2579 = vsub.s32 5, %v2578
        %v2580 = vrot.slane %v2555, %v2579
        %v2581 = vlaneseq
        %v2582 = vshrl.u32 %v2581, 7
        %v2583 = vsub.s32 6, %v2582
        %v2584 = vrot.slane %v2555, %v2583
        %v2585 = vlaneseq
        %v2586 = vshrl.u32 %v2585, 7
        %v2587 = vsub.s32 7, %v2586
        %v2588 = vrot.slane %v2555, %v2587
        %v2597 = vmul.f32 %v2408, %v2560
        %v2598 = vmul.f32 %v2409, %v2564
        %v2599 = vmul.f32 %v2410, %v2568
        %v2600 = vmul.f32 %v2411, %v2572
        %v2601 = vmul.f32 %v2412, %v2576
        %v2602 = vmul.f32 %v2413, %v2580
        %v2603 = vmul.f32 %v2414, %v2584
        %v2604 = vmul.f32 %v2415, %v2588
        %v2605 = vld [vmem:[%s390] sm:$0xff]
        %v2607 = vlaneseq
        %v2608 = vshrl.u32 %v2607, 7
        %v2609 = vsub.s32 0, %v2608
        %v2610 = vrot.slane %v2605, %v2609
        %v2611 = vlaneseq
        %v2612 = vshrl.u32 %v2611, 7
        %v2613 = vsub.s32 1, %v2612
        %v2614 = vrot.slane %v2605, %v2613
        %v2615 = vlaneseq
        %v2616 = vshrl.u32 %v2615, 7
        %v2617 = vsub.s32 2, %v2616
        %v2618 = vrot.slane %v2605, %v2617
        %v2619 = vlaneseq
        %v2620 = vshrl.u32 %v2619, 7
        %v2621 = vsub.s32 3, %v2620
        %v2622 = vrot.slane %v2605, %v2621
        %v2623 = vlaneseq
        %v2624 = vshrl.u32 %v2623, 7
        %v2625 = vsub.s32 4, %v2624
        %v2626 = vrot.slane %v2605, %v2625
        %v2627 = vlaneseq
        %v2628 = vshrl.u32 %v2627, 7
        %v2629 = vsub.s32 5, %v2628
        %v2630 = vrot.slane %v2605, %v2629
        %v2631 = vlaneseq
        %v2632 = vshrl.u32 %v2631, 7
        %v2633 = vsub.s32 6, %v2632
        %v2634 = vrot.slane %v2605, %v2633
        %v2635 = vlaneseq
        %v2636 = vshrl.u32 %v2635, 7
        %v2637 = vsub.s32 7, %v2636
        %v2638 = vrot.slane %v2605, %v2637
        %v2647 = vadd.f32 %v2597, %v2610
        %v2648 = vadd.f32 %v2598, %v2614
        %v2649 = vadd.f32 %v2599, %v2618
        %v2650 = vadd.f32 %v2600, %v2622
        %v2651 = vadd.f32 %v2601, %v2626
        %v2652 = vadd.f32 %v2602, %v2630
        %v2653 = vadd.f32 %v2603, %v2634
        %v2654 = vadd.f32 %v2604, %v2638
        %v2655 = vmax.f32 %v2647, 0.0
        %v2656 = vmax.f32 %v2648, 0.0
        %v2657 = vmax.f32 %v2649, 0.0
        %v2658 = vmax.f32 %v2650, 0.0
        %v2659 = vmax.f32 %v2651, 0.0
        %v2660 = vmax.f32 %v2652, 0.0
        %v2661 = vmax.f32 %v2653, 0.0
        %v2662 = vmax.f32 %v2654, 0.0
        %v2663 = vld [vmem:[%s454] sm:$0xff]
        %v2664 = vpack.c.bf16 %v2655, %v2655
        %v2665 = vpack.c.bf16 %v2656, %v2656
        %v2666 = vpack.c.bf16 %v2657, %v2657
        %v2667 = vpack.c.bf16 %v2658, %v2658
        %v2668 = vpack.c.bf16 %v2659, %v2659
        %v2669 = vpack.c.bf16 %v2660, %v2660
        %v2670 = vpack.c.bf16 %v2661, %v2661
        %v2671 = vpack.c.bf16 %v2662, %v2662
        %v2672 = vld [vmem:[%s399] sm:$0xf]
        %v2673 = vld [vmem:[%s399 + $0x4] sm:$0xf]
        %v2674 = vld [vmem:[%s399 + $0x8] sm:$0xf]
        %v2675 = vld [vmem:[%s399 + $0xc] sm:$0xf]
        %v2676 = vld [vmem:[%s399 + $0x10] sm:$0xf]
        %v2677 = vld [vmem:[%s399 + $0x14] sm:$0xf]
        %v2678 = vld [vmem:[%s399 + $0x18] sm:$0xf]
        %v2679 = vld [vmem:[%s399 + $0x1c] sm:$0xf]
        %v2680 = vld [vmem:[%s399 + $0x20] sm:$0xf]
        %v2681 = vld [vmem:[%s399 + $0x24] sm:$0xf]
        %v2682 = vld [vmem:[%s399 + $0x28] sm:$0xf]
        %v2683 = vld [vmem:[%s399 + $0x2c] sm:$0xf]
        %v2684 = vld [vmem:[%s399 + $0x30] sm:$0xf]
        %v2685 = vld [vmem:[%s399 + $0x34] sm:$0xf]
        %v2686 = vld [vmem:[%s399 + $0x38] sm:$0xf]
        %v2687 = vld [vmem:[%s399 + $0x3c] sm:$0xf]
        %v2688 = vld [vmem:[%s399 + $0x40] sm:$0xf]
        %v2689 = vld [vmem:[%s399 + $0x44] sm:$0xf]
        %v2690 = vld [vmem:[%s399 + $0x48] sm:$0xf]
        %v2691 = vld [vmem:[%s399 + $0x4c] sm:$0xf]
        %v2692 = vld [vmem:[%s399 + $0x50] sm:$0xf]
        %v2693 = vld [vmem:[%s399 + $0x54] sm:$0xf]
        %v2694 = vld [vmem:[%s399 + $0x58] sm:$0xf]
        %v2695 = vld [vmem:[%s399 + $0x5c] sm:$0xf]
        %v2696 = vld [vmem:[%s399 + $0x60] sm:$0xf]
        %v2697 = vld [vmem:[%s399 + $0x64] sm:$0xf]
        %v2698 = vld [vmem:[%s399 + $0x68] sm:$0xf]
        %v2699 = vld [vmem:[%s399 + $0x6c] sm:$0xf]
        %v2700 = vld [vmem:[%s399 + $0x70] sm:$0xf]
        %v2701 = vld [vmem:[%s399 + $0x74] sm:$0xf]
        %v2702 = vld [vmem:[%s399 + $0x78] sm:$0xf]
        %v2703 = vld [vmem:[%s399 + $0x7c] sm:$0xf]
        %v2704 = vld [vmem:[%s399 + $0x80] sm:$0xf]
        %v2705 = vld [vmem:[%s399 + $0x84] sm:$0xf]
        %v2706 = vld [vmem:[%s399 + $0x88] sm:$0xf]
        %v2707 = vld [vmem:[%s399 + $0x8c] sm:$0xf]
        %v2708 = vld [vmem:[%s399 + $0x90] sm:$0xf]
        %v2709 = vld [vmem:[%s399 + $0x94] sm:$0xf]
        %v2710 = vld [vmem:[%s399 + $0x98] sm:$0xf]
        %v2711 = vld [vmem:[%s399 + $0x9c] sm:$0xf]
        %v2712 = vld [vmem:[%s399 + $0xa0] sm:$0xf]
        %v2713 = vld [vmem:[%s399 + $0xa4] sm:$0xf]
        %v2714 = vld [vmem:[%s399 + $0xa8] sm:$0xf]
        %v2715 = vld [vmem:[%s399 + $0xac] sm:$0xf]
        %v2716 = vld [vmem:[%s399 + $0xb0] sm:$0xf]
        %v2717 = vld [vmem:[%s399 + $0xb4] sm:$0xf]
        %v2718 = vld [vmem:[%s399 + $0xb8] sm:$0xf]
        %v2719 = vld [vmem:[%s399 + $0xbc] sm:$0xf]
        %v2720 = vld [vmem:[%s399 + $0xc0] sm:$0xf]
        %v2721 = vld [vmem:[%s399 + $0xc4] sm:$0xf]
        %v2722 = vld [vmem:[%s399 + $0xc8] sm:$0xf]
        %v2723 = vld [vmem:[%s399 + $0xcc] sm:$0xf]
        %v2724 = vld [vmem:[%s399 + $0xd0] sm:$0xf]
        %v2725 = vld [vmem:[%s399 + $0xd4] sm:$0xf]
        %v2726 = vld [vmem:[%s399 + $0xd8] sm:$0xf]
        %v2727 = vld [vmem:[%s399 + $0xdc] sm:$0xf]
        %v2728 = vld [vmem:[%s399 + $0xe0] sm:$0xf]
        %v2729 = vld [vmem:[%s399 + $0xe4] sm:$0xf]
        %v2730 = vld [vmem:[%s399 + $0xe8] sm:$0xf]
        %v2731 = vld [vmem:[%s399 + $0xec] sm:$0xf]
        %v2732 = vld [vmem:[%s399 + $0xf0] sm:$0xf]
        %v2733 = vld [vmem:[%s399 + $0xf4] sm:$0xf]
        %v2734 = vld [vmem:[%s399 + $0xf8] sm:$0xf]
        %v2735 = vld [vmem:[%s399 + $0xfc] sm:$0xf]
        %v2736 = vld [vmem:[%s399 + $0x100] sm:$0xf]
        %v2737 = vld [vmem:[%s399 + $0x104] sm:$0xf]
        %v2738 = vld [vmem:[%s399 + $0x108] sm:$0xf]
        %v2739 = vld [vmem:[%s399 + $0x10c] sm:$0xf]
        %v2740 = vld [vmem:[%s399 + $0x110] sm:$0xf]
        %v2741 = vld [vmem:[%s399 + $0x114] sm:$0xf]
        %v2742 = vld [vmem:[%s399 + $0x118] sm:$0xf]
        %v2743 = vld [vmem:[%s399 + $0x11c] sm:$0xf]
        %v2744 = vld [vmem:[%s399 + $0x120] sm:$0xf]
        %v2745 = vld [vmem:[%s399 + $0x124] sm:$0xf]
        %v2746 = vld [vmem:[%s399 + $0x128] sm:$0xf]
        %v2747 = vld [vmem:[%s399 + $0x12c] sm:$0xf]
        %v2748 = vld [vmem:[%s399 + $0x130] sm:$0xf]
        %v2749 = vld [vmem:[%s399 + $0x134] sm:$0xf]
        %v2750 = vld [vmem:[%s399 + $0x138] sm:$0xf]
        %v2751 = vld [vmem:[%s399 + $0x13c] sm:$0xf]
        %v2752 = vld [vmem:[%s399 + $0x140] sm:$0xf]
        %v2753 = vld [vmem:[%s399 + $0x144] sm:$0xf]
        %v2754 = vld [vmem:[%s399 + $0x148] sm:$0xf]
        %v2755 = vld [vmem:[%s399 + $0x14c] sm:$0xf]
        %v2756 = vld [vmem:[%s399 + $0x150] sm:$0xf]
        %v2757 = vld [vmem:[%s399 + $0x154] sm:$0xf]
        %v2758 = vld [vmem:[%s399 + $0x158] sm:$0xf]
        %v2759 = vld [vmem:[%s399 + $0x15c] sm:$0xf]
        %v2760 = vld [vmem:[%s399 + $0x160] sm:$0xf]
        %v2761 = vld [vmem:[%s399 + $0x164] sm:$0xf]
        %v2762 = vld [vmem:[%s399 + $0x168] sm:$0xf]
        %v2763 = vld [vmem:[%s399 + $0x16c] sm:$0xf]
        %v2764 = vld [vmem:[%s399 + $0x170] sm:$0xf]
        %v2765 = vld [vmem:[%s399 + $0x174] sm:$0xf]
        %v2766 = vld [vmem:[%s399 + $0x178] sm:$0xf]
        %v2767 = vld [vmem:[%s399 + $0x17c] sm:$0xf]
        %v2768 = vld [vmem:[%s399 + $0x180] sm:$0xf]
        %v2769 = vld [vmem:[%s399 + $0x184] sm:$0xf]
        %v2770 = vld [vmem:[%s399 + $0x188] sm:$0xf]
        %v2771 = vld [vmem:[%s399 + $0x18c] sm:$0xf]
        %v2772 = vld [vmem:[%s399 + $0x190] sm:$0xf]
        %v2773 = vld [vmem:[%s399 + $0x194] sm:$0xf]
        %v2774 = vld [vmem:[%s399 + $0x198] sm:$0xf]
        %v2775 = vld [vmem:[%s399 + $0x19c] sm:$0xf]
        %v2776 = vld [vmem:[%s399 + $0x1a0] sm:$0xf]
        %v2777 = vld [vmem:[%s399 + $0x1a4] sm:$0xf]
        %v2778 = vld [vmem:[%s399 + $0x1a8] sm:$0xf]
        %v2779 = vld [vmem:[%s399 + $0x1ac] sm:$0xf]
        %v2780 = vld [vmem:[%s399 + $0x1b0] sm:$0xf]
        %v2781 = vld [vmem:[%s399 + $0x1b4] sm:$0xf]
        %v2782 = vld [vmem:[%s399 + $0x1b8] sm:$0xf]
        %v2783 = vld [vmem:[%s399 + $0x1bc] sm:$0xf]
        %v2784 = vld [vmem:[%s399 + $0x1c0] sm:$0xf]
        %v2785 = vld [vmem:[%s399 + $0x1c4] sm:$0xf]
        %v2786 = vld [vmem:[%s399 + $0x1c8] sm:$0xf]
        %v2787 = vld [vmem:[%s399 + $0x1cc] sm:$0xf]
        %v2788 = vld [vmem:[%s399 + $0x1d0] sm:$0xf]
        %v2789 = vld [vmem:[%s399 + $0x1d4] sm:$0xf]
        %v2790 = vld [vmem:[%s399 + $0x1d8] sm:$0xf]
        %v2791 = vld [vmem:[%s399 + $0x1dc] sm:$0xf]
        %v2792 = vld [vmem:[%s399 + $0x1e0] sm:$0xf]
        %v2793 = vld [vmem:[%s399 + $0x1e4] sm:$0xf]
        %v2794 = vld [vmem:[%s399 + $0x1e8] sm:$0xf]
        %v2795 = vld [vmem:[%s399 + $0x1ec] sm:$0xf]
        %v2796 = vld [vmem:[%s399 + $0x1f0] sm:$0xf]
        %v2797 = vld [vmem:[%s399 + $0x1f4] sm:$0xf]
        %v2798 = vld [vmem:[%s399 + $0x1f8] sm:$0xf]
        %v2799 = vld [vmem:[%s399 + $0x1fc] sm:$0xf]
        %v2928 = vunpack.c.l.b16 %v2672
        %v2929 = vunpack.c.l.b16 %v2673
        %v2930 = vunpack.c.l.b16 %v2674
        %v2931 = vunpack.c.l.b16 %v2675
        %v2932 = vunpack.c.l.b16 %v2676
        %v2933 = vunpack.c.l.b16 %v2677
        %v2934 = vunpack.c.l.b16 %v2678
        %v2935 = vunpack.c.l.b16 %v2679
        %v2936 = vunpack.c.l.b16 %v2680
        %v2937 = vunpack.c.l.b16 %v2681
        %v2938 = vunpack.c.l.b16 %v2682
        %v2939 = vunpack.c.l.b16 %v2683
        %v2940 = vunpack.c.l.b16 %v2684
        %v2941 = vunpack.c.l.b16 %v2685
        %v2942 = vunpack.c.l.b16 %v2686
        %v2943 = vunpack.c.l.b16 %v2687
        %v2944 = vunpack.c.l.b16 %v2688
        %v2945 = vunpack.c.l.b16 %v2689
        %v2946 = vunpack.c.l.b16 %v2690
        %v2947 = vunpack.c.l.b16 %v2691
        %v2948 = vunpack.c.l.b16 %v2692
        %v2949 = vunpack.c.l.b16 %v2693
        %v2950 = vunpack.c.l.b16 %v2694
        %v2951 = vunpack.c.l.b16 %v2695
        %v2952 = vunpack.c.l.b16 %v2696
        %v2953 = vunpack.c.l.b16 %v2697
        %v2954 = vunpack.c.l.b16 %v2698
        %v2955 = vunpack.c.l.b16 %v2699
        %v2956 = vunpack.c.l.b16 %v2700
        %v2957 = vunpack.c.l.b16 %v2701
        %v2958 = vunpack.c.l.b16 %v2702
        %v2959 = vunpack.c.l.b16 %v2703
        %v2960 = vunpack.c.l.b16 %v2704
        %v2961 = vunpack.c.l.b16 %v2705
        %v2962 = vunpack.c.l.b16 %v2706
        %v2963 = vunpack.c.l.b16 %v2707
        %v2964 = vunpack.c.l.b16 %v2708
        %v2965 = vunpack.c.l.b16 %v2709
        %v2966 = vunpack.c.l.b16 %v2710
        %v2967 = vunpack.c.l.b16 %v2711
        %v2968 = vunpack.c.l.b16 %v2712
        %v2969 = vunpack.c.l.b16 %v2713
        %v2970 = vunpack.c.l.b16 %v2714
        %v2971 = vunpack.c.l.b16 %v2715
        %v2972 = vunpack.c.l.b16 %v2716
        %v2973 = vunpack.c.l.b16 %v2717
        %v2974 = vunpack.c.l.b16 %v2718
        %v2975 = vunpack.c.l.b16 %v2719
        %v2976 = vunpack.c.l.b16 %v2720
        %v2977 = vunpack.c.l.b16 %v2721
        %v2978 = vunpack.c.l.b16 %v2722
        %v2979 = vunpack.c.l.b16 %v2723
        %v2980 = vunpack.c.l.b16 %v2724
        %v2981 = vunpack.c.l.b16 %v2725
        %v2982 = vunpack.c.l.b16 %v2726
        %v2983 = vunpack.c.l.b16 %v2727
        %v2984 = vunpack.c.l.b16 %v2728
        %v2985 = vunpack.c.l.b16 %v2729
        %v2986 = vunpack.c.l.b16 %v2730
        %v2987 = vunpack.c.l.b16 %v2731
        %v2988 = vunpack.c.l.b16 %v2732
        %v2989 = vunpack.c.l.b16 %v2733
        %v2990 = vunpack.c.l.b16 %v2734
        %v2991 = vunpack.c.l.b16 %v2735
        %v2992 = vunpack.c.l.b16 %v2736
        %v2993 = vunpack.c.l.b16 %v2737
        %v2994 = vunpack.c.l.b16 %v2738
        %v2995 = vunpack.c.l.b16 %v2739
        %v2996 = vunpack.c.l.b16 %v2740
        %v2997 = vunpack.c.l.b16 %v2741
        %v2998 = vunpack.c.l.b16 %v2742
        %v2999 = vunpack.c.l.b16 %v2743
        %v3000 = vunpack.c.l.b16 %v2744
        %v3001 = vunpack.c.l.b16 %v2745
        %v3002 = vunpack.c.l.b16 %v2746
        %v3003 = vunpack.c.l.b16 %v2747
        %v3004 = vunpack.c.l.b16 %v2748
        %v3005 = vunpack.c.l.b16 %v2749
        %v3006 = vunpack.c.l.b16 %v2750
        %v3007 = vunpack.c.l.b16 %v2751
        %v3008 = vunpack.c.l.b16 %v2752
        %v3009 = vunpack.c.l.b16 %v2753
        %v3010 = vunpack.c.l.b16 %v2754
        %v3011 = vunpack.c.l.b16 %v2755
        %v3012 = vunpack.c.l.b16 %v2756
        %v3013 = vunpack.c.l.b16 %v2757
        %v3014 = vunpack.c.l.b16 %v2758
        %v3015 = vunpack.c.l.b16 %v2759
        %v3016 = vunpack.c.l.b16 %v2760
        %v3017 = vunpack.c.l.b16 %v2761
        %v3018 = vunpack.c.l.b16 %v2762
        %v3019 = vunpack.c.l.b16 %v2763
        %v3020 = vunpack.c.l.b16 %v2764
        %v3021 = vunpack.c.l.b16 %v2765
        %v3022 = vunpack.c.l.b16 %v2766
        %v3023 = vunpack.c.l.b16 %v2767
        %v3024 = vunpack.c.l.b16 %v2768
        %v3025 = vunpack.c.l.b16 %v2769
        %v3026 = vunpack.c.l.b16 %v2770
        %v3027 = vunpack.c.l.b16 %v2771
        %v3028 = vunpack.c.l.b16 %v2772
        %v3029 = vunpack.c.l.b16 %v2773
        %v3030 = vunpack.c.l.b16 %v2774
        %v3031 = vunpack.c.l.b16 %v2775
        %v3032 = vunpack.c.l.b16 %v2776
        %v3033 = vunpack.c.l.b16 %v2777
        %v3034 = vunpack.c.l.b16 %v2778
        %v3035 = vunpack.c.l.b16 %v2779
        %v3036 = vunpack.c.l.b16 %v2780
        %v3037 = vunpack.c.l.b16 %v2781
        %v3038 = vunpack.c.l.b16 %v2782
        %v3039 = vunpack.c.l.b16 %v2783
        %v3040 = vunpack.c.l.b16 %v2784
        %v3041 = vunpack.c.l.b16 %v2785
        %v3042 = vunpack.c.l.b16 %v2786
        %v3043 = vunpack.c.l.b16 %v2787
        %v3044 = vunpack.c.l.b16 %v2788
        %v3045 = vunpack.c.l.b16 %v2789
        %v3046 = vunpack.c.l.b16 %v2790
        %v3047 = vunpack.c.l.b16 %v2791
        %v3048 = vunpack.c.l.b16 %v2792
        %v3049 = vunpack.c.l.b16 %v2793
        %v3050 = vunpack.c.l.b16 %v2794
        %v3051 = vunpack.c.l.b16 %v2795
        %v3052 = vunpack.c.l.b16 %v2796
        %v3053 = vunpack.c.l.b16 %v2797
        %v3054 = vunpack.c.l.b16 %v2798
        %v3055 = vunpack.c.l.b16 %v2799
        %v3056 = vpack.c.b16 %v2929, %v2928
        %v3057 = vpack.c.b16 %v2931, %v2930
        %v3058 = vpack.c.b16 %v2933, %v2932
        %v3059 = vpack.c.b16 %v2935, %v2934
        %v3060 = vpack.c.b16 %v2937, %v2936
        %v3061 = vpack.c.b16 %v2939, %v2938
        %v3062 = vpack.c.b16 %v2941, %v2940
        %v3063 = vpack.c.b16 %v2943, %v2942
        %v3064 = vpack.c.b16 %v2945, %v2944
        %v3065 = vpack.c.b16 %v2947, %v2946
        %v3066 = vpack.c.b16 %v2949, %v2948
        %v3067 = vpack.c.b16 %v2951, %v2950
        %v3068 = vpack.c.b16 %v2953, %v2952
        %v3069 = vpack.c.b16 %v2955, %v2954
        %v3070 = vpack.c.b16 %v2957, %v2956
        %v3071 = vpack.c.b16 %v2959, %v2958
        %v3072 = vpack.c.b16 %v2961, %v2960
        %v3073 = vpack.c.b16 %v2963, %v2962
        %v3074 = vpack.c.b16 %v2965, %v2964
        %v3075 = vpack.c.b16 %v2967, %v2966
        %v3076 = vpack.c.b16 %v2969, %v2968
        %v3077 = vpack.c.b16 %v2971, %v2970
        %v3078 = vpack.c.b16 %v2973, %v2972
        %v3079 = vpack.c.b16 %v2975, %v2974
        %v3080 = vpack.c.b16 %v2977, %v2976
        %v3081 = vpack.c.b16 %v2979, %v2978
        %v3082 = vpack.c.b16 %v2981, %v2980
        %v3083 = vpack.c.b16 %v2983, %v2982
        %v3084 = vpack.c.b16 %v2985, %v2984
        %v3085 = vpack.c.b16 %v2987, %v2986
        %v3086 = vpack.c.b16 %v2989, %v2988
        %v3087 = vpack.c.b16 %v2991, %v2990
        %v3088 = vpack.c.b16 %v2993, %v2992
        %v3089 = vpack.c.b16 %v2995, %v2994
        %v3090 = vpack.c.b16 %v2997, %v2996
        %v3091 = vpack.c.b16 %v2999, %v2998
        %v3092 = vpack.c.b16 %v3001, %v3000
        %v3093 = vpack.c.b16 %v3003, %v3002
        %v3094 = vpack.c.b16 %v3005, %v3004
        %v3095 = vpack.c.b16 %v3007, %v3006
        %v3096 = vpack.c.b16 %v3009, %v3008
        %v3097 = vpack.c.b16 %v3011, %v3010
        %v3098 = vpack.c.b16 %v3013, %v3012
        %v3099 = vpack.c.b16 %v3015, %v3014
        %v3100 = vpack.c.b16 %v3017, %v3016
        %v3101 = vpack.c.b16 %v3019, %v3018
        %v3102 = vpack.c.b16 %v3021, %v3020
        %v3103 = vpack.c.b16 %v3023, %v3022
        %v3104 = vpack.c.b16 %v3025, %v3024
        %v3105 = vpack.c.b16 %v3027, %v3026
        %v3106 = vpack.c.b16 %v3029, %v3028
        %v3107 = vpack.c.b16 %v3031, %v3030
        %v3108 = vpack.c.b16 %v3033, %v3032
        %v3109 = vpack.c.b16 %v3035, %v3034
        %v3110 = vpack.c.b16 %v3037, %v3036
        %v3111 = vpack.c.b16 %v3039, %v3038
        %v3112 = vpack.c.b16 %v3041, %v3040
        %v3113 = vpack.c.b16 %v3043, %v3042
        %v3114 = vpack.c.b16 %v3045, %v3044
        %v3115 = vpack.c.b16 %v3047, %v3046
        %v3116 = vpack.c.b16 %v3049, %v3048
        %v3117 = vpack.c.b16 %v3051, %v3050
        %v3118 = vpack.c.b16 %v3053, %v3052
        %v3119 = vpack.c.b16 %v3055, %v3054
        %3184 = vmatprep.subr.bf16.mxu0 0
        %3185 = vmatpush1.bf16.msra.mxu0 %v3056
        %3186 = vmatprep.subr.bf16.mxu0 0
        %3187 = vmatpush1.bf16.msra.mxu0 %v3057
        %3188 = vmatprep.subr.bf16.mxu0 0
        %3189 = vmatpush1.bf16.msra.mxu0 %v3058
        %3190 = vmatprep.subr.bf16.mxu0 0
        %3191 = vmatpush1.bf16.msra.mxu0 %v3059
        %3192 = vmatprep.subr.bf16.mxu0 0
        %3193 = vmatpush1.bf16.msra.mxu0 %v3060
        %3194 = vmatprep.subr.bf16.mxu0 0
        %3195 = vmatpush1.bf16.msra.mxu0 %v3061
        %3196 = vmatprep.subr.bf16.mxu0 0
        %3197 = vmatpush1.bf16.msra.mxu0 %v3062
        %3198 = vmatprep.subr.bf16.mxu0 0
        %3199 = vmatpush1.bf16.msra.mxu0 %v3063
        %3200 = vmatprep.subr.bf16.mxu0 0
        %3201 = vmatpush1.bf16.msra.mxu0 %v3064
        %3202 = vmatprep.subr.bf16.mxu0 0
        %3203 = vmatpush1.bf16.msra.mxu0 %v3065
        %3204 = vmatprep.subr.bf16.mxu0 0
        %3205 = vmatpush1.bf16.msra.mxu0 %v3066
        %3206 = vmatprep.subr.bf16.mxu0 0
        %3207 = vmatpush1.bf16.msra.mxu0 %v3067
        %3208 = vmatprep.subr.bf16.mxu0 0
        %3209 = vmatpush1.bf16.msra.mxu0 %v3068
        %3210 = vmatprep.subr.bf16.mxu0 0
        %3211 = vmatpush1.bf16.msra.mxu0 %v3069
        %3212 = vmatprep.subr.bf16.mxu0 0
        %3213 = vmatpush1.bf16.msra.mxu0 %v3070
        %3214 = vmatprep.subr.bf16.mxu0 0
        %3215 = vmatpush1.bf16.msra.mxu0 %v3071
        %3216 = vmatprep.mubr.bf16.mxu0 %v2665
        %3217 = vmatmul.mubr.bf16.gmra.mrb[0].mxu0 %v2664
        %v3218 = vpop.f32.mrb[0].mxu0
        %v3219 = vadd.f32 0.0, %v3218
        %v3220 = vpop.f32.mrb[0].mxu0
        %v3221 = vpop.f32.mrb[0].mxu0
        %v3222 = vpop.f32.mrb[0].mxu0
        %3223 = vdwg.mxu0
        %3224 = vmatprep.subr.bf16.mxu0 0
        %3225 = vmatpush1.bf16.msra.mxu0 %v3072
        %3226 = vmatprep.subr.bf16.mxu0 0
        %3227 = vmatpush1.bf16.msra.mxu0 %v3073
        %3228 = vmatprep.subr.bf16.mxu0 0
        %3229 = vmatpush1.bf16.msra.mxu0 %v3074
        %3230 = vmatprep.subr.bf16.mxu0 0
        %3231 = vmatpush1.bf16.msra.mxu0 %v3075
        %3232 = vmatprep.subr.bf16.mxu0 0
        %3233 = vmatpush1.bf16.msra.mxu0 %v3076
        %3234 = vmatprep.subr.bf16.mxu0 0
        %3235 = vmatpush1.bf16.msra.mxu0 %v3077
        %3236 = vmatprep.subr.bf16.mxu0 0
        %3237 = vmatpush1.bf16.msra.mxu0 %v3078
        %3238 = vmatprep.subr.bf16.mxu0 0
        %3239 = vmatpush1.bf16.msra.mxu0 %v3079
        %3240 = vmatprep.subr.bf16.mxu0 0
        %3241 = vmatpush1.bf16.msra.mxu0 %v3080
        %3242 = vmatprep.subr.bf16.mxu0 0
        %3243 = vmatpush1.bf16.msra.mxu0 %v3081
        %3244 = vmatprep.subr.bf16.mxu0 0
        %3245 = vmatpush1.bf16.msra.mxu0 %v3082
        %3246 = vmatprep.subr.bf16.mxu0 0
        %3247 = vmatpush1.bf16.msra.mxu0 %v3083
        %3248 = vmatprep.subr.bf16.mxu0 0
        %3249 = vmatpush1.bf16.msra.mxu0 %v3084
        %3250 = vmatprep.subr.bf16.mxu0 0
        %3251 = vmatpush1.bf16.msra.mxu0 %v3085
        %3252 = vmatprep.subr.bf16.mxu0 0
        %3253 = vmatpush1.bf16.msra.mxu0 %v3086
        %3254 = vmatprep.subr.bf16.mxu0 0
        %3255 = vmatpush1.bf16.msra.mxu0 %v3087
        %3256 = vmatprep.mubr.bf16.mxu0 %v2667
        %3257 = vmatmul.mubr.bf16.gmra.mrb[0].mxu0 %v2666
        %v3258 = vpop.f32.mrb[0].mxu0
        %v3259 = vadd.f32 %v3219, %v3258
        %v3260 = vpop.f32.mrb[0].mxu0
        %v3261 = vpop.f32.mrb[0].mxu0
        %v3262 = vpop.f32.mrb[0].mxu0
        %3263 = vdwg.mxu0
        %3264 = vmatprep.subr.bf16.mxu0 0
        %3265 = vmatpush1.bf16.msra.mxu0 %v3088
        %3266 = vmatprep.subr.bf16.mxu0 0
        %3267 = vmatpush1.bf16.msra.mxu0 %v3089
        %3268 = vmatprep.subr.bf16.mxu0 0
        %3269 = vmatpush1.bf16.msra.mxu0 %v3090
        %3270 = vmatprep.subr.bf16.mxu0 0
        %3271 = vmatpush1.bf16.msra.mxu0 %v3091
        %3272 = vmatprep.subr.bf16.mxu0 0
        %3273 = vmatpush1.bf16.msra.mxu0 %v3092
        %3274 = vmatprep.subr.bf16.mxu0 0
        %3275 = vmatpush1.bf16.msra.mxu0 %v3093
        %3276 = vmatprep.subr.bf16.mxu0 0
        %3277 = vmatpush1.bf16.msra.mxu0 %v3094
        %3278 = vmatprep.subr.bf16.mxu0 0
        %3279 = vmatpush1.bf16.msra.mxu0 %v3095
        %3280 = vmatprep.subr.bf16.mxu0 0
        %3281 = vmatpush1.bf16.msra.mxu0 %v3096
        %3282 = vmatprep.subr.bf16.mxu0 0
        %3283 = vmatpush1.bf16.msra.mxu0 %v3097
        %3284 = vmatprep.subr.bf16.mxu0 0
        %3285 = vmatpush1.bf16.msra.mxu0 %v3098
        %3286 = vmatprep.subr.bf16.mxu0 0
        %3287 = vmatpush1.bf16.msra.mxu0 %v3099
        %3288 = vmatprep.subr.bf16.mxu0 0
        %3289 = vmatpush1.bf16.msra.mxu0 %v3100
        %3290 = vmatprep.subr.bf16.mxu0 0
        %3291 = vmatpush1.bf16.msra.mxu0 %v3101
        %3292 = vmatprep.subr.bf16.mxu0 0
        %3293 = vmatpush1.bf16.msra.mxu0 %v3102
        %3294 = vmatprep.subr.bf16.mxu0 0
        %3295 = vmatpush1.bf16.msra.mxu0 %v3103
        %3296 = vmatprep.mubr.bf16.mxu0 %v2669
        %3297 = vmatmul.mubr.bf16.gmra.mrb[0].mxu0 %v2668
        %v3298 = vpop.f32.mrb[0].mxu0
        %v3299 = vadd.f32 %v3259, %v3298
        %v3300 = vpop.f32.mrb[0].mxu0
        %v3301 = vpop.f32.mrb[0].mxu0
        %v3302 = vpop.f32.mrb[0].mxu0
        %3303 = vdwg.mxu0
        %3304 = vmatprep.subr.bf16.mxu0 0
        %3305 = vmatpush1.bf16.msra.mxu0 %v3104
        %3306 = vmatprep.subr.bf16.mxu0 0
        %3307 = vmatpush1.bf16.msra.mxu0 %v3105
        %3308 = vmatprep.subr.bf16.mxu0 0
        %3309 = vmatpush1.bf16.msra.mxu0 %v3106
        %3310 = vmatprep.subr.bf16.mxu0 0
        %3311 = vmatpush1.bf16.msra.mxu0 %v3107
        %3312 = vmatprep.subr.bf16.mxu0 0
        %3313 = vmatpush1.bf16.msra.mxu0 %v3108
        %3314 = vmatprep.subr.bf16.mxu0 0
        %3315 = vmatpush1.bf16.msra.mxu0 %v3109
        %3316 = vmatprep.subr.bf16.mxu0 0
        %3317 = vmatpush1.bf16.msra.mxu0 %v3110
        %3318 = vmatprep.subr.bf16.mxu0 0
        %3319 = vmatpush1.bf16.msra.mxu0 %v3111
        %3320 = vmatprep.subr.bf16.mxu0 0
        %3321 = vmatpush1.bf16.msra.mxu0 %v3112
        %3322 = vmatprep.subr.bf16.mxu0 0
        %3323 = vmatpush1.bf16.msra.mxu0 %v3113
        %3324 = vmatprep.subr.bf16.mxu0 0
        %3325 = vmatpush1.bf16.msra.mxu0 %v3114
        %3326 = vmatprep.subr.bf16.mxu0 0
        %3327 = vmatpush1.bf16.msra.mxu0 %v3115
        %3328 = vmatprep.subr.bf16.mxu0 0
        %3329 = vmatpush1.bf16.msra.mxu0 %v3116
        %3330 = vmatprep.subr.bf16.mxu0 0
        %3331 = vmatpush1.bf16.msra.mxu0 %v3117
        %3332 = vmatprep.subr.bf16.mxu0 0
        %3333 = vmatpush1.bf16.msra.mxu0 %v3118
        %3334 = vmatprep.subr.bf16.mxu0 0
        %3335 = vmatpush1.bf16.msra.mxu0 %v3119
        %3336 = vmatprep.mubr.bf16.mxu0 %v2671
        %3337 = vmatmul.mubr.bf16.gmra.mrb[0].mxu0 %v2670
        %v3338 = vpop.f32.mrb[0].mxu0
        %v3339 = vadd.f32 %v3299, %v3338
        %v3340 = vpop.f32.mrb[0].mxu0
        %v3341 = vpop.f32.mrb[0].mxu0
        %v3342 = vpop.f32.mrb[0].mxu0
        %3343 = vdwg.mxu0
        %v3344 = vadd.f32 %v2663, %v3339
        %3345 = vst [vmem:[%s454] sm:$0xff] %v3344
        %s3346 = sand.u32 %s209, 1
        %s3347 = scalar_lea.sflag [#allocation4], %s3346
        %s3348 = sand.u32 %s209, 1
        %s3349 = smul.addr %s3348, 8
        %s3350 = scalar_lea.vmem [#allocation13], %s3349
        // Predicated region
        $region73: #{tpu_custom_call.1} parent=43 // pred_check
          %p3351 = pneg %p219
        $region74: #{tpu_custom_call.1} parent=43 // pred_check_branch
          %3353 = sbr.rel (%p3351) target = $region76
        $region75: #{tpu_custom_call.1} parent=43 // pred_region
          %s3355 = ssub.s32 128, 128
          %3356 = vsyncadd %s3347, %s3355
          %s3357 = smul.addr %s34, 128
          %s3358 = scalar_lea.hbm %s6, %s3357
          %s3360 = sshll.u32 %s3350, 4
          %s3361 = int_to_ptr.vmem [resolvable:$true] %s3360
          %3363 = dma.vmem_to_hbm [thread:$0]  %s3361, 128, %s3358, %s3347
        $region76: #{tpu_custom_call.1} parent=43 // pred_fallthru
          _
      $region44: #{tpu_custom_call.1} parent=5 // pred_fallthru
        _
      %p3364 = scmp.le.s32.totalorder 2, %s25
      // Predicated region
      $region77: #{tpu_custom_call.1} parent=5 // pred_check
        %p3365 = pneg %p3364
      $region78: #{tpu_custom_call.1} parent=5 // pred_check_branch
        %3367 = sbr.rel (%p3365) target = $region80
      $region79: #{tpu_custom_call.1} parent=5 // pred_region
        %s3368 = ssub.s32 %s25, 2
        // Predicated region
        $region81: #{tpu_custom_call.1} parent=79 // pred_check
          %p3369 = pneg %p225
        $region82: #{tpu_custom_call.1} parent=79 // pred_check_branch
          %3371 = sbr.rel (%p3369) target = $region84
        $region83: #{tpu_custom_call.1} parent=79 // pred_region
          %s3372 = sand.u32 %s210, 1
          %s3373 = scalar_lea.sflag [#allocation4], %s3372
          %s3374 = sand.u32 %s210, 1
          %s3375 = smul.addr %s3374, 8
          %s3376 = scalar_lea.vmem [#allocation13], %s3375
          %3377 = dma.done %s3373, 128
        $region84: #{tpu_custom_call.1} parent=79 // pred_fallthru
          _
      $region80: #{tpu_custom_call.1} parent=5 // pred_fallthru
        _
    $region6: #{tpu_custom_call.1} parent=1 // loop_footer
      %s29 = sadd.s32 1, %s25
    $region7: #{tpu_custom_call.1} parent=1 // loop_footer_branch
      %24 = sbr.rel target = $region3
    $region8: #{tpu_custom_call.1} parent=1 // loop_exit
      _
    %3378 = vsyncpa [#allocation3], 1
    %s3379 = scalar_lea.sflag [#allocation3], 1
    %3380 = vsyncpa %s3379, 1
    %3381 = vsyncpa [#allocation6], 1
    %s3382 = scalar_lea.sflag [#allocation6], 1
    %3383 = vsyncpa %s3382, 1
    %3384 = vsyncpa [#allocation9], 1
    %s3385 = scalar_lea.sflag [#allocation9], 1
    %3386 = vsyncpa %s3385, 1
    %3387 = vsyncpa [#allocation12], 1
    %s3388 = scalar_lea.sflag [#allocation12], 1
    %3389 = vsyncpa %s3388, 1
    %3390 = vsyncpa [#allocation4], 1
    %s3391 = scalar_lea.sflag [#allocation4], 1
    %3392 = vsyncpa %s3391, 1

</llo_original>
